<compile_context>
chip_gen: v7x
topology: tpu7x:2x2x1
jax: 0.10.0
libtpu: 0.0.40
codegen_flags: <defaults>
</compile_context>

<pallas_src>
import functools

import jax
import jax.numpy as jnp
import numpy as np
from jax.experimental import pallas as pl
from jax.experimental.pallas import tpu as pltpu

EPS = 1e-5


def _resblk_kernel(xp_ref, m1_ref, m2_ref, msc_ref, g_ref, bnp_ref, out_ref,
                   *, N, H, W, Cin, Cout):
    NH = N * H
    WCi = W * Cin
    WCo = W * Cout
    inv_cnt = 1.0 / float(N * H * W)

    G = g_ref[...]  # (WCo, WCo) per-channel group-sum-and-broadcast matrix

    def bn(h, gamma_t, beta_t):
        # One-pass training-mode BN on a lane-dense (NH, W*Cout) slab.
        s1 = jnp.sum(h, axis=0, keepdims=True)        # (1, WCo)
        s2 = jnp.sum(h * h, axis=0, keepdims=True)    # (1, WCo)
        stats = jnp.concatenate([s1, s2], axis=0)     # (2, WCo)
        stats = jnp.dot(stats, G, preferred_element_type=jnp.float32)
        mean = stats[0:1, :] * inv_cnt
        var = stats[1:2, :] * inv_cnt - mean * mean
        scale = gamma_t * jax.lax.rsqrt(var + EPS)
        shift = beta_t - mean * scale
        return h * scale + shift

    xp = xp_ref[...]                                   # (N, H+2, W*Cin), row-padded
    x_c = xp[:, 1:H + 1, :].reshape(NH, WCi)           # dy=1 slab (also shortcut input)

    # ---- conv1: three banded matmuls (dy = 0,1,2); dx + channel mix baked into M1 ----
    acc1 = jnp.dot(x_c, m1_ref[1], preferred_element_type=jnp.float32)
    acc1 = acc1 + jnp.dot(xp[:, 0:H, :].reshape(NH, WCi), m1_ref[0],
                          preferred_element_type=jnp.float32)
    acc1 = acc1 + jnp.dot(xp[:, 2:H + 2, :].reshape(NH, WCi), m1_ref[2],
                          preferred_element_type=jnp.float32)

    h1 = jnp.maximum(bn(acc1, bnp_ref[0:1, :], bnp_ref[1:2, :]), 0.0)    # (NH, WCo)

    # ---- conv2: row shifts of h1 with image-boundary masks (no padded scratch) ----
    y = jax.lax.broadcasted_iota(jnp.int32, (NH, 1), 0) % H
    zrow = jnp.zeros((1, WCo), jnp.float32)
    h1_up = jnp.where(y == 0, 0.0,
                      jnp.concatenate([zrow, h1[:NH - 1, :]], axis=0))   # row y-1
    h1_dn = jnp.where(y == H - 1, 0.0,
                      jnp.concatenate([h1[1:, :], zrow], axis=0))        # row y+1

    acc2 = jnp.dot(h1, m2_ref[1], preferred_element_type=jnp.float32)
    acc2 = acc2 + jnp.dot(h1_up, m2_ref[0], preferred_element_type=jnp.float32)
    acc2 = acc2 + jnp.dot(h1_dn, m2_ref[2], preferred_element_type=jnp.float32)

    h2 = jnp.maximum(bn(acc2, bnp_ref[2:3, :], bnp_ref[3:4, :]), 0.0)

    # ---- shortcut: 1x1 conv (block-diagonal matmul) + BN ----
    sc = jnp.dot(x_c, msc_ref[...], preferred_element_type=jnp.float32)
    sc = bn(sc, bnp_ref[4:5, :], bnp_ref[5:6, :])

    # ---- residual add: lane-dense (NH, W*Cout) output, unmasked stores ----
    out_ref[...] = h2 + sc


def _pack_operands(x_nchw, params):
    """Wrapper-side layout plumbing: lane-dense activations + repacked weights."""
    N, Cin, H, W = x_nchw.shape
    Cout = params["w1"].shape[-1]
    f32 = jnp.float32

    # Activations: NCHW -> (N, H, W*Cin), zero-pad rows (dy halo) only.
    x = jnp.transpose(x_nchw, (0, 2, 3, 1)).astype(f32).reshape(N, H, W * Cin)
    xp = jnp.pad(x, ((0, 0), (1, 1), (0, 0)))

    # Banded conv matrices: M[dy][(a,ci),(b,co)] = w[dy, a-b+1, ci, co] for |a-b| <= 1.
    ar = jnp.arange(W)
    S = (ar[None, :, None] ==
         ar[None, None, :] + jnp.arange(3)[:, None, None] - 1).astype(f32)   # (3, W, W)
    M1 = jnp.einsum("xab,yxio->yaibo", S,
                    params["w1"].astype(f32)).reshape(3, W * Cin, W * Cout)
    M2 = jnp.einsum("xab,yxio->yaibo", S,
                    params["w2"].astype(f32)).reshape(3, W * Cout, W * Cout)
    Msc = jnp.einsum("ab,io->aibo", jnp.eye(W, dtype=f32),
                     params["wsc"].astype(f32)).reshape(W * Cin, W * Cout)

    # Group-sum/broadcast matrix for one-pass per-channel BN stats on the lane axis.
    G = jnp.kron(jnp.ones((W, W), f32), jnp.eye(Cout, dtype=f32))            # (WCo, WCo)

    # Pack all BN affine params into one lane-dense slab (gamma/beta tiled per lane).
    def tile(p):
        return jnp.tile(p.reshape(-1).astype(f32), W)
    bnp = jnp.stack([tile(params["g1"]), tile(params["be1"]),
                     tile(params["g2"]), tile(params["be2"]),
                     tile(params["gsc"]), tile(params["besc"])], axis=0)      # (6, WCo)

    # Conv biases b1/b2/bsc are intentionally NOT passed: training-mode BN subtracts
    # the batch mean immediately, so per-channel biases are exact no-ops.
    return xp, M1, M2, Msc, G, bnp, (N, H, W, Cin, Cout)


def resblk_forward(x_nchw, params):
    """x_nchw: (N, Cin, H, W) float32. Returns (N, Cout, H, W)."""
    xp, M1, M2, Msc, G, bnp, (N, H, W, Cin, Cout) = _pack_operands(x_nchw, params)

    vmem = pl.BlockSpec(memory_space=pltpu.MemorySpace.VMEM)
    kernel = functools.partial(_resblk_kernel, N=N, H=H, W=W, Cin=Cin, Cout=Cout)

    out2d = pl.pallas_call(
        kernel,
        out_shape=jax.ShapeDtypeStruct((N * H, W * Cout), jnp.float32),
        in_specs=[vmem] * 6,
        out_specs=vmem,
        compiler_params=pltpu.CompilerParams(vmem_limit_bytes=32 * 1024 * 1024),
    )(xp, M1, M2, Msc, G, bnp)

    out = out2d.reshape(N, H, W, Cout)
    return jnp.transpose(out, (0, 3, 1, 2))


# ----------------------------- pure-JAX reference -----------------------------
def _ref_bn(h, gamma, beta):
    mean = jnp.mean(h, axis=(0, 1, 2), keepdims=True)
    var = jnp.mean((h - mean) ** 2, axis=(0, 1, 2), keepdims=True)
    return (h - mean) * jax.lax.rsqrt(var + EPS) * gamma.reshape(1, 1, 1, -1) \
        + beta.reshape(1, 1, 1, -1)


def resblk_reference(x_nchw, params):
    x = jnp.transpose(x_nchw, (0, 2, 3, 1)).astype(jnp.float32)  # NHWC
    dn = ("NHWC", "HWIO", "NHWC")

    h = jax.lax.conv_general_dilated(x, params["w1"], (1, 1), ((1, 1), (1, 1)),
                                     dimension_numbers=dn) + params["b1"].reshape(1, 1, 1, -1)
    h = jnp.maximum(_ref_bn(h, params["g1"], params["be1"]), 0.0)
    h = jax.lax.conv_general_dilated(h, params["w2"], (1, 1), ((1, 1), (1, 1)),
                                     dimension_numbers=dn) + params["b2"].reshape(1, 1, 1, -1)
    h = jnp.maximum(_ref_bn(h, params["g2"], params["be2"]), 0.0)

    sc = jnp.einsum("nhwc,co->nhwo", x, params["wsc"]) + params["bsc"].reshape(1, 1, 1, -1)
    sc = _ref_bn(sc, params["gsc"], params["besc"])

    return jnp.transpose(sc + h, (0, 3, 1, 2))


# ----------------------------- parameter init -----------------------------
def init_params(key, ch_in, ch_out):
    ks = jax.random.split(key, 8)
    p = {
        "w1": jax.random.normal(ks[0], (3, 3, ch_in, ch_out), jnp.float32) * 0.1,
        "b1": jax.random.normal(ks[1], (1, ch_out), jnp.float32) * 0.05,
        "g1": 1.0 + jax.random.normal(ks[2], (1, ch_out), jnp.float32) * 0.05,
        "be1": jax.random.normal(ks[3], (1, ch_out), jnp.float32) * 0.05,
        "w2": jax.random.normal(ks[4], (3, 3, ch_out, ch_out), jnp.float32) * 0.1,
        "b2": jax.random.normal(ks[5], (1, ch_out), jnp.float32) * 0.05,
        "g2": 1.0 + jax.random.normal(ks[6], (1, ch_out), jnp.float32) * 0.05,
        "be2": jax.random.normal(ks[7], (1, ch_out), jnp.float32) * 0.05,
    }
    ks2 = jax.random.split(jax.random.fold_in(key, 123), 4)
    p["wsc"] = jax.random.normal(ks2[0], (ch_in, ch_out), jnp.float32) * 0.1
    p["bsc"] = jax.random.normal(ks2[1], (1, ch_out), jnp.float32) * 0.05
    p["gsc"] = 1.0 + jax.random.normal(ks2[2], (1, ch_out), jnp.float32) * 0.05
    p["besc"] = jax.random.normal(ks2[3], (1, ch_out), jnp.float32) * 0.05
    return p


if __name__ == "__main__":
    key = jax.random.PRNGKey(0)
    k_x, k_p = jax.random.split(key)

    N, CH_IN, CH_OUT, H, W = 2, 4, 8, 16, 16   # ch_in != ch_out -> conv1x1+BN shortcut
    x = jax.random.normal(k_x, (N, CH_IN, H, W), jnp.float32)   # NCHW, like PyTorch
    params = init_params(k_p, CH_IN, CH_OUT)

    out = resblk_forward(x, params)
    out = jax.block_until_ready(out)

    ref = jax.block_until_ready(resblk_reference(x, params))
    assert out.shape == (N, CH_OUT, H, W)
    np.testing.assert_allclose(np.asarray(out), np.asarray(ref), rtol=1e-3, atol=1e-3)

    print("KERNEL_OK")
</pallas_src>

<mosaic_0001>
module attributes {stable_mosaic.version = 11 : i64} {
  func.func @_resblk_kernel(%arg0: memref<2x18x64xf32, #tpu.memory_space<vmem>>, %arg1: memref<3x64x128xf32, #tpu.memory_space<vmem>>, %arg2: memref<3x128x128xf32, #tpu.memory_space<vmem>>, %arg3: memref<64x128xf32, #tpu.memory_space<vmem>>, %arg4: memref<128x128xf32, #tpu.memory_space<vmem>>, %arg5: memref<6x128xf32, #tpu.memory_space<vmem>>, %arg6: memref<32x128xf32, #tpu.memory_space<vmem>>) attributes {dimension_semantics = [], scalar_prefetch = 0 : i64, scratch_operands = 0 : i64, tpu.core_type = #tpu.core_type<tc>} {
    %c0 = arith.constant 0 : index
    %c0_0 = arith.constant 0 : index
    %0 = vector.load %arg4[%c0, %c0_0] : memref<128x128xf32, #tpu.memory_space<vmem>>, vector<128x128xf32>
    %c0_1 = arith.constant 0 : index
    %c0_2 = arith.constant 0 : index
    %c0_3 = arith.constant 0 : index
    %1 = vector.load %arg0[%c0_1, %c0_2, %c0_3] : memref<2x18x64xf32, #tpu.memory_space<vmem>>, vector<2x18x64xf32>
    %2 = vector.extract_strided_slice %1 {offsets = [0, 1, 0], sizes = [2, 16, 64], strides = [1, 1, 1]} : vector<2x18x64xf32> to vector<2x16x64xf32>
    %3 = vector.shape_cast %2 : vector<2x16x64xf32> to vector<32x64xf32>
    %c1 = arith.constant 1 : index
    %c0_4 = arith.constant 0 : index
    %c0_5 = arith.constant 0 : index
    %4 = vector.load %arg1[%c1, %c0_4, %c0_5] : memref<3x64x128xf32, #tpu.memory_space<vmem>>, vector<1x64x128xf32>
    %5 = vector.shape_cast %4 : vector<1x64x128xf32> to vector<64x128xf32>
    %cst = arith.constant dense<0.000000e+00> : vector<32x128xf32>
    %6 = tpu.matmul %3, %5, %cst {dimension_numbers = #tpu.dot_dimension_numbers<[1], [0], [0], [1], [0, 0, 1, 1], [], []>} : vector<32x64xf32>, vector<64x128xf32>, vector<32x128xf32> -> vector<32x128xf32>
    %7 = vector.extract_strided_slice %1 {offsets = [0, 0, 0], sizes = [2, 16, 64], strides = [1, 1, 1]} : vector<2x18x64xf32> to vector<2x16x64xf32>
    %8 = vector.shape_cast %7 : vector<2x16x64xf32> to vector<32x64xf32>
    %c0_6 = arith.constant 0 : index
    %c0_7 = arith.constant 0 : index
    %c0_8 = arith.constant 0 : index
    %9 = vector.load %arg1[%c0_6, %c0_7, %c0_8] : memref<3x64x128xf32, #tpu.memory_space<vmem>>, vector<1x64x128xf32>
    %10 = vector.shape_cast %9 : vector<1x64x128xf32> to vector<64x128xf32>
    %cst_9 = arith.constant dense<0.000000e+00> : vector<32x128xf32>
    %11 = tpu.matmul %8, %10, %cst_9 {dimension_numbers = #tpu.dot_dimension_numbers<[1], [0], [0], [1], [0, 0, 1, 1], [], []>} : vector<32x64xf32>, vector<64x128xf32>, vector<32x128xf32> -> vector<32x128xf32>
    %12 = arith.addf %6, %11 : vector<32x128xf32>
    %13 = vector.extract_strided_slice %1 {offsets = [0, 2, 0], sizes = [2, 16, 64], strides = [1, 1, 1]} : vector<2x18x64xf32> to vector<2x16x64xf32>
    %14 = vector.shape_cast %13 : vector<2x16x64xf32> to vector<32x64xf32>
    %c2 = arith.constant 2 : index
    %c0_10 = arith.constant 0 : index
    %c0_11 = arith.constant 0 : index
    %15 = vector.load %arg1[%c2, %c0_10, %c0_11] : memref<3x64x128xf32, #tpu.memory_space<vmem>>, vector<1x64x128xf32>
    %16 = vector.shape_cast %15 : vector<1x64x128xf32> to vector<64x128xf32>
    %cst_12 = arith.constant dense<0.000000e+00> : vector<32x128xf32>
    %17 = tpu.matmul %14, %16, %cst_12 {dimension_numbers = #tpu.dot_dimension_numbers<[1], [0], [0], [1], [0, 0, 1, 1], [], []>} : vector<32x64xf32>, vector<64x128xf32>, vector<32x128xf32> -> vector<32x128xf32>
    %18 = arith.addf %12, %17 : vector<32x128xf32>
    %c0_13 = arith.constant 0 : index
    %c0_14 = arith.constant 0 : index
    %19 = vector.load %arg5[%c0_13, %c0_14] : memref<6x128xf32, #tpu.memory_space<vmem>>, vector<1x128xf32>
    %c1_15 = arith.constant 1 : index
    %c0_16 = arith.constant 0 : index
    %20 = vector.load %arg5[%c1_15, %c0_16] : memref<6x128xf32, #tpu.memory_space<vmem>>, vector<1x128xf32>
    %cst_17 = arith.constant dense<0.000000e+00> : vector<128xf32>
    %21 = vector.multi_reduction <add>, %18, %cst_17 [0] : vector<32x128xf32> to vector<128xf32>
    %22 = vector.shape_cast %21 : vector<128xf32> to vector<1x128xf32>
    %23 = arith.mulf %18, %18 : vector<32x128xf32>
    %cst_18 = arith.constant dense<0.000000e+00> : vector<128xf32>
    %24 = vector.multi_reduction <add>, %23, %cst_18 [0] : vector<32x128xf32> to vector<128xf32>
    %25 = vector.shape_cast %24 : vector<128xf32> to vector<1x128xf32>
    %26 = tpu.concatenate %22, %25 in 0 : vector<1x128xf32>, vector<1x128xf32> -> vector<2x128xf32>
    %cst_19 = arith.constant dense<0.000000e+00> : vector<2x128xf32>
    %27 = tpu.matmul %26, %0, %cst_19 {dimension_numbers = #tpu.dot_dimension_numbers<[1], [0], [0], [1], [0, 0, 1, 1], [], []>} : vector<2x128xf32>, vector<128x128xf32>, vector<2x128xf32> -> vector<2x128xf32>
    %28 = vector.extract_strided_slice %27 {offsets = [0, 0], sizes = [1, 128], strides = [1, 1]} : vector<2x128xf32> to vector<1x128xf32>
    %cst_20 = arith.constant 0.001953125 : f32
    %29 = vector.broadcast %cst_20 : f32 to vector<1x128xf32>
    %30 = arith.mulf %28, %29 : vector<1x128xf32>
    %31 = vector.extract_strided_slice %27 {offsets = [1, 0], sizes = [1, 128], strides = [1, 1]} : vector<2x128xf32> to vector<1x128xf32>
    %cst_21 = arith.constant 0.001953125 : f32
    %32 = vector.broadcast %cst_21 : f32 to vector<1x128xf32>
    %33 = arith.mulf %31, %32 : vector<1x128xf32>
    %34 = arith.mulf %30, %30 : vector<1x128xf32>
    %35 = arith.subf %33, %34 : vector<1x128xf32>
    %cst_22 = arith.constant 9.99999974E-6 : f32
    %36 = vector.broadcast %cst_22 : f32 to vector<1x128xf32>
    %37 = arith.addf %35, %36 : vector<1x128xf32>
    %38 = math.rsqrt %37 : vector<1x128xf32>
    %39 = arith.mulf %19, %38 : vector<1x128xf32>
    %40 = arith.mulf %30, %39 : vector<1x128xf32>
    %41 = arith.subf %20, %40 : vector<1x128xf32>
    %42 = vector.broadcast %39 : vector<1x128xf32> to vector<32x128xf32>
    %43 = arith.mulf %18, %42 : vector<32x128xf32>
    %44 = vector.broadcast %41 : vector<1x128xf32> to vector<32x128xf32>
    %45 = arith.addf %43, %44 : vector<32x128xf32>
    %cst_23 = arith.constant 0.000000e+00 : f32
    %46 = vector.broadcast %cst_23 : f32 to vector<32x128xf32>
    %47 = arith.maximumf %45, %46 : vector<32x128xf32>
    %48 = tpu.iota {dimensions = array<i32: 0>} : vector<32x1xi32>
    %c16_i32 = arith.constant 16 : i32
    %c0_i32 = arith.constant 0 : i32
    %49 = arith.cmpi eq, %c16_i32, %c0_i32 : i32
    %c1_i32 = arith.constant 1 : i32
    %50 = arith.select %49, %c1_i32, %c16_i32 : i32
    %51 = vector.broadcast %50 : i32 to vector<32x1xi32>
    %52 = arith.remsi %48, %51 : vector<32x1xi32>
    %c0_i32_24 = arith.constant 0 : i32
    %53 = vector.broadcast %c0_i32_24 : i32 to vector<32x1xi32>
    %54 = arith.cmpi ne, %52, %53 : vector<32x1xi32>
    %c0_i32_25 = arith.constant 0 : i32
    %55 = vector.broadcast %c0_i32_25 : i32 to vector<32x1xi32>
    %56 = arith.cmpi slt, %52, %55 : vector<32x1xi32>
    %c0_i32_26 = arith.constant 0 : i32
    %57 = arith.cmpi slt, %50, %c0_i32_26 : i32
    %58 = vector.broadcast %57 : i1 to vector<32x1xi1>
    %59 = vector.broadcast %58 : vector<32x1xi1> to vector<32x1xi1>
    %60 = arith.xori %56, %59 : vector<32x1xi1>
    %61 = arith.andi %60, %54 : vector<32x1xi1>
    %62 = vector.broadcast %50 : i32 to vector<32x1xi32>
    %63 = arith.addi %52, %62 : vector<32x1xi32>
    %64 = arith.select %61, %63, %52 : vector<32x1xi1>, vector<32x1xi32>
    %cst_27 = arith.constant 0.000000e+00 : f32
    %65 = vector.broadcast %cst_27 : f32 to vector<1x128xf32>
    %c0_i32_28 = arith.constant 0 : i32
    %66 = vector.broadcast %c0_i32_28 : i32 to vector<32x1xi32>
    %67 = arith.cmpi eq, %64, %66 : vector<32x1xi32>
    %68 = vector.extract_strided_slice %47 {offsets = [0, 0], sizes = [31, 128], strides = [1, 1]} : vector<32x128xf32> to vector<31x128xf32>
    %69 = tpu.concatenate %65, %68 in 0 : vector<1x128xf32>, vector<31x128xf32> -> vector<32x128xf32>
    %cst_29 = arith.constant 0.000000e+00 : f32
    %70 = vector.shape_cast %67 : vector<32x1xi1> to vector<32x1xi1>
    %71 = vector.broadcast %70 : vector<32x1xi1> to vector<32x128xi1>
    %72 = vector.broadcast %cst_29 : f32 to vector<32x128xf32>
    %73 = arith.select %71, %72, %69 : vector<32x128xi1>, vector<32x128xf32>
    %c15_i32 = arith.constant 15 : i32
    %74 = vector.broadcast %c15_i32 : i32 to vector<32x1xi32>
    %75 = arith.cmpi eq, %64, %74 : vector<32x1xi32>
    %76 = vector.extract_strided_slice %47 {offsets = [1, 0], sizes = [31, 128], strides = [1, 1]} : vector<32x128xf32> to vector<31x128xf32>
    %77 = tpu.concatenate %76, %65 in 0 : vector<31x128xf32>, vector<1x128xf32> -> vector<32x128xf32>
    %cst_30 = arith.constant 0.000000e+00 : f32
    %78 = vector.shape_cast %75 : vector<32x1xi1> to vector<32x1xi1>
    %79 = vector.broadcast %78 : vector<32x1xi1> to vector<32x128xi1>
    %80 = vector.broadcast %cst_30 : f32 to vector<32x128xf32>
    %81 = arith.select %79, %80, %77 : vector<32x128xi1>, vector<32x128xf32>
    %c1_31 = arith.constant 1 : index
    %c0_32 = arith.constant 0 : index
    %c0_33 = arith.constant 0 : index
    %82 = vector.load %arg2[%c1_31, %c0_32, %c0_33] : memref<3x128x128xf32, #tpu.memory_space<vmem>>, vector<1x128x128xf32>
    %83 = vector.shape_cast %82 : vector<1x128x128xf32> to vector<128x128xf32>
    %cst_34 = arith.constant dense<0.000000e+00> : vector<32x128xf32>
    %84 = tpu.matmul %47, %83, %cst_34 {dimension_numbers = #tpu.dot_dimension_numbers<[1], [0], [0], [1], [0, 0, 1, 1], [], []>} : vector<32x128xf32>, vector<128x128xf32>, vector<32x128xf32> -> vector<32x128xf32>
    %c0_35 = arith.constant 0 : index
    %c0_36 = arith.constant 0 : index
    %c0_37 = arith.constant 0 : index
    %85 = vector.load %arg2[%c0_35, %c0_36, %c0_37] : memref<3x128x128xf32, #tpu.memory_space<vmem>>, vector<1x128x128xf32>
    %86 = vector.shape_cast %85 : vector<1x128x128xf32> to vector<128x128xf32>
    %cst_38 = arith.constant dense<0.000000e+00> : vector<32x128xf32>
    %87 = tpu.matmul %73, %86, %cst_38 {dimension_numbers = #tpu.dot_dimension_numbers<[1], [0], [0], [1], [0, 0, 1, 1], [], []>} : vector<32x128xf32>, vector<128x128xf32>, vector<32x128xf32> -> vector<32x128xf32>
    %88 = arith.addf %84, %87 : vector<32x128xf32>
    %c2_39 = arith.constant 2 : index
    %c0_40 = arith.constant 0 : index
    %c0_41 = arith.constant 0 : index
    %89 = vector.load %arg2[%c2_39, %c0_40, %c0_41] : memref<3x128x128xf32, #tpu.memory_space<vmem>>, vector<1x128x128xf32>
    %90 = vector.shape_cast %89 : vector<1x128x128xf32> to vector<128x128xf32>
    %cst_42 = arith.constant dense<0.000000e+00> : vector<32x128xf32>
    %91 = tpu.matmul %81, %90, %cst_42 {dimension_numbers = #tpu.dot_dimension_numbers<[1], [0], [0], [1], [0, 0, 1, 1], [], []>} : vector<32x128xf32>, vector<128x128xf32>, vector<32x128xf32> -> vector<32x128xf32>
    %92 = arith.addf %88, %91 : vector<32x128xf32>
    %c2_43 = arith.constant 2 : index
    %c0_44 = arith.constant 0 : index
    %93 = vector.load %arg5[%c2_43, %c0_44] : memref<6x128xf32, #tpu.memory_space<vmem>>, vector<1x128xf32>
    %c3 = arith.constant 3 : index
    %c0_45 = arith.constant 0 : index
    %94 = vector.load %arg5[%c3, %c0_45] : memref<6x128xf32, #tpu.memory_space<vmem>>, vector<1x128xf32>
    %cst_46 = arith.constant dense<0.000000e+00> : vector<128xf32>
    %95 = vector.multi_reduction <add>, %92, %cst_46 [0] : vector<32x128xf32> to vector<128xf32>
    %96 = vector.shape_cast %95 : vector<128xf32> to vector<1x128xf32>
    %97 = arith.mulf %92, %92 : vector<32x128xf32>
    %cst_47 = arith.constant dense<0.000000e+00> : vector<128xf32>
    %98 = vector.multi_reduction <add>, %97, %cst_47 [0] : vector<32x128xf32> to vector<128xf32>
    %99 = vector.shape_cast %98 : vector<128xf32> to vector<1x128xf32>
    %100 = tpu.concatenate %96, %99 in 0 : vector<1x128xf32>, vector<1x128xf32> -> vector<2x128xf32>
    %cst_48 = arith.constant dense<0.000000e+00> : vector<2x128xf32>
    %101 = tpu.matmul %100, %0, %cst_48 {dimension_numbers = #tpu.dot_dimension_numbers<[1], [0], [0], [1], [0, 0, 1, 1], [], []>} : vector<2x128xf32>, vector<128x128xf32>, vector<2x128xf32> -> vector<2x128xf32>
    %102 = vector.extract_strided_slice %101 {offsets = [0, 0], sizes = [1, 128], strides = [1, 1]} : vector<2x128xf32> to vector<1x128xf32>
    %cst_49 = arith.constant 0.001953125 : f32
    %103 = vector.broadcast %cst_49 : f32 to vector<1x128xf32>
    %104 = arith.mulf %102, %103 : vector<1x128xf32>
    %105 = vector.extract_strided_slice %101 {offsets = [1, 0], sizes = [1, 128], strides = [1, 1]} : vector<2x128xf32> to vector<1x128xf32>
    %cst_50 = arith.constant 0.001953125 : f32
    %106 = vector.broadcast %cst_50 : f32 to vector<1x128xf32>
    %107 = arith.mulf %105, %106 : vector<1x128xf32>
    %108 = arith.mulf %104, %104 : vector<1x128xf32>
    %109 = arith.subf %107, %108 : vector<1x128xf32>
    %cst_51 = arith.constant 9.99999974E-6 : f32
    %110 = vector.broadcast %cst_51 : f32 to vector<1x128xf32>
    %111 = arith.addf %109, %110 : vector<1x128xf32>
    %112 = math.rsqrt %111 : vector<1x128xf32>
    %113 = arith.mulf %93, %112 : vector<1x128xf32>
    %114 = arith.mulf %104, %113 : vector<1x128xf32>
    %115 = arith.subf %94, %114 : vector<1x128xf32>
    %116 = vector.broadcast %113 : vector<1x128xf32> to vector<32x128xf32>
    %117 = arith.mulf %92, %116 : vector<32x128xf32>
    %118 = vector.broadcast %115 : vector<1x128xf32> to vector<32x128xf32>
    %119 = arith.addf %117, %118 : vector<32x128xf32>
    %cst_52 = arith.constant 0.000000e+00 : f32
    %120 = vector.broadcast %cst_52 : f32 to vector<32x128xf32>
    %121 = arith.maximumf %119, %120 : vector<32x128xf32>
    %c0_53 = arith.constant 0 : index
    %c0_54 = arith.constant 0 : index
    %122 = vector.load %arg3[%c0_53, %c0_54] : memref<64x128xf32, #tpu.memory_space<vmem>>, vector<64x128xf32>
    %cst_55 = arith.constant dense<0.000000e+00> : vector<32x128xf32>
    %123 = tpu.matmul %3, %122, %cst_55 {dimension_numbers = #tpu.dot_dimension_numbers<[1], [0], [0], [1], [0, 0, 1, 1], [], []>} : vector<32x64xf32>, vector<64x128xf32>, vector<32x128xf32> -> vector<32x128xf32>
    %c4 = arith.constant 4 : index
    %c0_56 = arith.constant 0 : index
    %124 = vector.load %arg5[%c4, %c0_56] : memref<6x128xf32, #tpu.memory_space<vmem>>, vector<1x128xf32>
    %c5 = arith.constant 5 : index
    %c0_57 = arith.constant 0 : index
    %125 = vector.load %arg5[%c5, %c0_57] : memref<6x128xf32, #tpu.memory_space<vmem>>, vector<1x128xf32>
    %cst_58 = arith.constant dense<0.000000e+00> : vector<128xf32>
    %126 = vector.multi_reduction <add>, %123, %cst_58 [0] : vector<32x128xf32> to vector<128xf32>
    %127 = vector.shape_cast %126 : vector<128xf32> to vector<1x128xf32>
    %128 = arith.mulf %123, %123 : vector<32x128xf32>
    %cst_59 = arith.constant dense<0.000000e+00> : vector<128xf32>
    %129 = vector.multi_reduction <add>, %128, %cst_59 [0] : vector<32x128xf32> to vector<128xf32>
    %130 = vector.shape_cast %129 : vector<128xf32> to vector<1x128xf32>
    %131 = tpu.concatenate %127, %130 in 0 : vector<1x128xf32>, vector<1x128xf32> -> vector<2x128xf32>
    %cst_60 = arith.constant dense<0.000000e+00> : vector<2x128xf32>
    %132 = tpu.matmul %131, %0, %cst_60 {dimension_numbers = #tpu.dot_dimension_numbers<[1], [0], [0], [1], [0, 0, 1, 1], [], []>} : vector<2x128xf32>, vector<128x128xf32>, vector<2x128xf32> -> vector<2x128xf32>
    %133 = vector.extract_strided_slice %132 {offsets = [0, 0], sizes = [1, 128], strides = [1, 1]} : vector<2x128xf32> to vector<1x128xf32>
    %cst_61 = arith.constant 0.001953125 : f32
    %134 = vector.broadcast %cst_61 : f32 to vector<1x128xf32>
    %135 = arith.mulf %133, %134 : vector<1x128xf32>
    %136 = vector.extract_strided_slice %132 {offsets = [1, 0], sizes = [1, 128], strides = [1, 1]} : vector<2x128xf32> to vector<1x128xf32>
    %cst_62 = arith.constant 0.001953125 : f32
    %137 = vector.broadcast %cst_62 : f32 to vector<1x128xf32>
    %138 = arith.mulf %136, %137 : vector<1x128xf32>
    %139 = arith.mulf %135, %135 : vector<1x128xf32>
    %140 = arith.subf %138, %139 : vector<1x128xf32>
    %cst_63 = arith.constant 9.99999974E-6 : f32
    %141 = vector.broadcast %cst_63 : f32 to vector<1x128xf32>
    %142 = arith.addf %140, %141 : vector<1x128xf32>
    %143 = math.rsqrt %142 : vector<1x128xf32>
    %144 = arith.mulf %124, %143 : vector<1x128xf32>
    %145 = arith.mulf %135, %144 : vector<1x128xf32>
    %146 = arith.subf %125, %145 : vector<1x128xf32>
    %147 = vector.broadcast %144 : vector<1x128xf32> to vector<32x128xf32>
    %148 = arith.mulf %123, %147 : vector<32x128xf32>
    %149 = vector.broadcast %146 : vector<1x128xf32> to vector<32x128xf32>
    %150 = arith.addf %148, %149 : vector<32x128xf32>
    %151 = arith.addf %121, %150 : vector<32x128xf32>
    %c0_64 = arith.constant 0 : index
    %c0_65 = arith.constant 0 : index
    %152 = vector.load %arg6[%c0_64, %c0_65] : memref<32x128xf32, #tpu.memory_space<vmem>>, vector<32x128xf32>
    tpu.vector_store %arg6[%c0_64, %c0_65], %151 {strides = array<i32>} : memref<32x128xf32, #tpu.memory_space<vmem>>, vector<32x128xf32>,
    return
  }
}

</mosaic_0001>

<llo_original>
// kernel: tpu_custom_call.1
$region0: #{tpu_custom_call.1}
  #allocation0 [shape = 'u32[]', space=smem, size = 0x4, offset = 0x4, fixed_abs, tag = 'smem constant byte address 0x4 - core index']
  #allocation1 [shape = 'u32[144,128]{1,0:T(1,128)}', space=vmem, size = 0x12000, scoped, tag = 'internal scratch']
  %s0 = inlined_call_operand.vmem [shape: f32[2,18,64], index: 0, kind: input, shape index: {}]
  %s1 = inlined_call_operand.hbm [shape: f32[3,64,128], index: 1, kind: input, shape index: {}]
  %s2 = inlined_call_operand.hbm [shape: f32[3,128,128], index: 2, kind: input, shape index: {}]
  %s3 = inlined_call_operand.vmem [shape: f32[64,128], index: 3, kind: input, shape index: {}]
  %s4 = inlined_call_operand.hbm [shape: f32[128,128], index: 4, kind: input, shape index: {}]
  %s5 = inlined_call_operand.vmem [shape: f32[6,128], index: 5, kind: input, shape index: {}]
  %s6 = inlined_call_operand.hbm [shape: f32[32,128], index: 6, kind: output, shape index: {}]
  %s7 = sld [smem:[#allocation0]]
  $region46: #{tpu_custom_call.1} parent=0
    _
  %s9 = ssub.s32 1, %s7
  %s10 = scalar_select 0, %s9, %s7
  $region1: #{tpu_custom_call.1} parent=0
    #allocation2 [shape = 'u8[98304]{0}', space=vmem, size = 0x18000, scoped, tag = 'input window, operand 1, single buffered']
    #allocation3 [shape = 's32[1]{0}', space=sflag, size = 0x4, scoped, tag = 'scoped memory for tpu_custom_call.1']
    #allocation4 [shape = 's32[1]{0}', space=sflag, size = 0x4, scoped, tag = 'scoped memory for tpu_custom_call.1']
    #allocation5 [shape = 'u8[196608]{0}', space=vmem, size = 0x30000, scoped, tag = 'input window, operand 2, single buffered']
    #allocation6 [shape = 's32[1]{0}', space=sflag, size = 0x4, scoped, tag = 'scoped memory for tpu_custom_call.1']
    #allocation7 [shape = 'u8[65536]{0}', space=vmem, size = 0x10000, scoped, tag = 'input window, operand 4, single buffered']
    #allocation8 [shape = 'u8[16384]{0}', space=vmem, size = 0x4000, scoped, tag = 'output window, operand 0, single buffered']
    %11 = vsyncpa [#allocation3], 0
    %12 = vsyncpa [#allocation6], 0
    %13 = vsyncpa [#allocation4], 0
    // Predicated region
    $region2: #{tpu_custom_call.1} parent=1 // pred_check
      _
    $region3: #{tpu_custom_call.1} parent=1 // pred_check_branch
      %15 = sbr.rel (0) target = $region5
    $region4: #{tpu_custom_call.1} parent=1 // pred_region
      _
    $region5: #{tpu_custom_call.1} parent=1 // pred_fallthru
      _
    // Predicated region
    $region6: #{tpu_custom_call.1} parent=1 // pred_check
      _
    $region7: #{tpu_custom_call.1} parent=1 // pred_check_branch
      %17 = sbr.rel (0) target = $region9
    $region8: #{tpu_custom_call.1} parent=1 // pred_region
      %s19 = ssub.s32 3072, 3072
      %20 = vsyncadd [#allocation3], %s19
      %s21 = sshll.u32 [#allocation2], 4
      %s22 = int_to_ptr.vmem [resolvable:$true] %s21
      %27 = dma.hbm_to_vmem [thread:$0]  %s1, 3072, %s22, [#allocation3], 128, 128, 8
    $region9: #{tpu_custom_call.1} parent=1 // pred_fallthru
      _
    // Predicated region
    $region10: #{tpu_custom_call.1} parent=1 // pred_check
      _
    $region11: #{tpu_custom_call.1} parent=1 // pred_check_branch
      %29 = sbr.rel (0) target = $region13
    $region12: #{tpu_custom_call.1} parent=1 // pred_region
      %s31 = ssub.s32 6144, 6144
      %32 = vsyncadd [#allocation6], %s31
      %s33 = sshll.u32 [#allocation5], 4
      %s34 = int_to_ptr.vmem [resolvable:$true] %s33
      %39 = dma.hbm_to_vmem [thread:$0]  %s2, 6144, %s34, [#allocation6], 128, 128, 8
    $region13: #{tpu_custom_call.1} parent=1 // pred_fallthru
      _
    // Predicated region
    $region14: #{tpu_custom_call.1} parent=1 // pred_check
      _
    $region15: #{tpu_custom_call.1} parent=1 // pred_check_branch
      %41 = sbr.rel (0) target = $region17
    $region16: #{tpu_custom_call.1} parent=1 // pred_region
      _
    $region17: #{tpu_custom_call.1} parent=1 // pred_fallthru
      _
    // Predicated region
    $region18: #{tpu_custom_call.1} parent=1 // pred_check
      _
    $region19: #{tpu_custom_call.1} parent=1 // pred_check_branch
      %43 = sbr.rel (0) target = $region21
    $region20: #{tpu_custom_call.1} parent=1 // pred_region
      %s45 = ssub.s32 2048, 2048
      %46 = vsyncadd [#allocation6], %s45
      %s47 = sshll.u32 [#allocation7], 4
      %s48 = int_to_ptr.vmem [resolvable:$true] %s47
      %53 = dma.hbm_to_vmem [thread:$0]  %s4, 2048, %s48, [#allocation6], 128, 128, 8
    $region21: #{tpu_custom_call.1} parent=1 // pred_fallthru
      _
    // Predicated region
    $region22: #{tpu_custom_call.1} parent=1 // pred_check
      _
    $region23: #{tpu_custom_call.1} parent=1 // pred_check_branch
      %55 = sbr.rel (0) target = $region25
    $region24: #{tpu_custom_call.1} parent=1 // pred_region
      _
    $region25: #{tpu_custom_call.1} parent=1 // pred_fallthru
      _
    // Predicated region
    $region26: #{tpu_custom_call.1} parent=1 // pred_check
      _
    $region27: #{tpu_custom_call.1} parent=1 // pred_check_branch
      %57 = sbr.rel (0) target = $region29
    $region28: #{tpu_custom_call.1} parent=1 // pred_region
      %58 = dma.done [#allocation3], 3072
    $region29: #{tpu_custom_call.1} parent=1 // pred_fallthru
      _
    // Predicated region
    $region30: #{tpu_custom_call.1} parent=1 // pred_check
      _
    $region31: #{tpu_custom_call.1} parent=1 // pred_check_branch
      %60 = sbr.rel (0) target = $region33
    $region32: #{tpu_custom_call.1} parent=1 // pred_region
      %61 = dma.done [#allocation6], 6144
    $region33: #{tpu_custom_call.1} parent=1 // pred_fallthru
      _
    // Predicated region
    $region34: #{tpu_custom_call.1} parent=1 // pred_check
      _
    $region35: #{tpu_custom_call.1} parent=1 // pred_check_branch
      %63 = sbr.rel (0) target = $region37
    $region36: #{tpu_custom_call.1} parent=1 // pred_region
      %64 = dma.done [#allocation6], 2048
    $region37: #{tpu_custom_call.1} parent=1 // pred_fallthru
      _
    %v65 = vld [vmem:[#allocation7] sm:$0xff]
    %v66 = vld [vmem:[#allocation7 + $0x8] sm:$0xff]
    %v67 = vld [vmem:[#allocation7 + $0x10] sm:$0xff]
    %v68 = vld [vmem:[#allocation7 + $0x18] sm:$0xff]
    %v69 = vld [vmem:[#allocation7 + $0x20] sm:$0xff]
    %v70 = vld [vmem:[#allocation7 + $0x28] sm:$0xff]
    %v71 = vld [vmem:[#allocation7 + $0x30] sm:$0xff]
    %v72 = vld [vmem:[#allocation7 + $0x38] sm:$0xff]
    %v73 = vld [vmem:[#allocation7 + $0x40] sm:$0xff]
    %v74 = vld [vmem:[#allocation7 + $0x48] sm:$0xff]
    %v75 = vld [vmem:[#allocation7 + $0x50] sm:$0xff]
    %v76 = vld [vmem:[#allocation7 + $0x58] sm:$0xff]
    %v77 = vld [vmem:[#allocation7 + $0x60] sm:$0xff]
    %v78 = vld [vmem:[#allocation7 + $0x68] sm:$0xff]
    %v79 = vld [vmem:[#allocation7 + $0x70] sm:$0xff]
    %v80 = vld [vmem:[#allocation7 + $0x78] sm:$0xff]
    %v81 = vld [vmem:[%s0] sm:$0xff]
    %v82 = vld [vmem:[%s0 + $0x8] sm:$0xff]
    %v83 = vld [vmem:[%s0 + $0x10] sm:$0x3]
    %v84 = vld [vmem:[%s0 + $0x18] sm:$0xff]
    %v85 = vld [vmem:[%s0 + $0x20] sm:$0xff]
    %v86 = vld [vmem:[%s0 + $0x28] sm:$0x3]
    %vm93 = vcmask 1046528
    %v94 = vrot.slane %v81, 1
    %v95 = vrot.slane %v82, 1
    %v96 = vsel %vm93, %v94, %v95
    %v97 = vrot.slane %v83, 1
    %v98 = vsel %vm93, %v95, %v97
    %v99 = vrot.slane %v84, 1
    %v100 = vrot.slane %v85, 1
    %v101 = vsel %vm93, %v99, %v100
    %v102 = vrot.slane %v86, 1
    %v103 = vsel %vm93, %v100, %v102
    %s104 = scalar_lea.vmem [#allocation2], 64
    %v105 = vld [vmem:[%s104] sm:$0xff]
    %v106 = vld [vmem:[%s104 + $0x8] sm:$0xff]
    %v107 = vld [vmem:[%s104 + $0x10] sm:$0xff]
    %v108 = vld [vmem:[%s104 + $0x18] sm:$0xff]
    %v109 = vld [vmem:[%s104 + $0x20] sm:$0xff]
    %v110 = vld [vmem:[%s104 + $0x28] sm:$0xff]
    %v111 = vld [vmem:[%s104 + $0x30] sm:$0xff]
    %v112 = vld [vmem:[%s104 + $0x38] sm:$0xff]
    %v113 = vld [vmem:[#allocation2] sm:$0xff]
    %v114 = vld [vmem:[#allocation2 + $0x8] sm:$0xff]
    %v115 = vld [vmem:[#allocation2 + $0x10] sm:$0xff]
    %v116 = vld [vmem:[#allocation2 + $0x18] sm:$0xff]
    %v117 = vld [vmem:[#allocation2 + $0x20] sm:$0xff]
    %v118 = vld [vmem:[#allocation2 + $0x28] sm:$0xff]
    %v119 = vld [vmem:[#allocation2 + $0x30] sm:$0xff]
    %v120 = vld [vmem:[#allocation2 + $0x38] sm:$0xff]
    %vm121 = vcmask 523264
    %v122 = vsel %vm121, %v81, 0
    %v124 = vsel %vm121, %v82, 0
    %v126 = vsel %vm121, %v84, 0
    %v128 = vsel %vm121, %v85, 0
    %130 = vmatprep.subr.mxu0 0.0
    %131 = vmatpush1.msra.mxu0 %v113
    %132 = vmatprep.subr.mxu0 0.0
    %133 = vmatpush1.msra.mxu0 %v114
    %134 = vmatprep.subr.mxu0 0.0
    %135 = vmatpush1.msra.mxu0 %v115
    %136 = vmatprep.subr.mxu0 0.0
    %137 = vmatpush1.msra.mxu0 %v116
    %138 = vmatprep.subr.mxu0 0.0
    %139 = vmatpush1.msra.mxu0 %v117
    %140 = vmatprep.subr.mxu0 0.0
    %141 = vmatpush1.msra.mxu0 %v118
    %142 = vmatprep.subr.mxu0 0.0
    %143 = vmatpush1.msra.mxu0 %v119
    %144 = vmatprep.subr.mxu0 0.0
    %145 = vmatpush1.msra.mxu0 %v120
    %146 = vmatprep.subr.mxu0 0.0
    %147 = vmatpush1.msra.mxu0 0.0
    %148 = vmatprep.subr.mxu0 0.0
    %149 = vmatpush1.msra.mxu0 0.0
    %150 = vmatprep.subr.mxu0 0.0
    %151 = vmatpush1.msra.mxu0 0.0
    %152 = vmatprep.subr.mxu0 0.0
    %153 = vmatpush1.msra.mxu0 0.0
    %154 = vmatprep.subr.mxu0 0.0
    %155 = vmatpush1.msra.mxu0 0.0
    %156 = vmatprep.subr.mxu0 0.0
    %157 = vmatpush1.msra.mxu0 0.0
    %158 = vmatprep.subr.mxu0 0.0
    %159 = vmatpush1.msra.mxu0 0.0
    %160 = vmatprep.subr.mxu0 0.0
    %161 = vmatpush1.msra.mxu0 0.0
    %162 = vmatprep.subr.mxu0 0.0
    %163 = vmatpush1.msra.mxu0 0.0
    %164 = vmatprep.subr.mxu0 0.0
    %165 = vmatpush1.msra.mxu0 0.0
    %166 = vmatprep.subr.mxu0 0.0
    %167 = vmatpush1.msra.mxu0 0.0
    %168 = vmatprep.subr.mxu0 0.0
    %169 = vmatpush1.msra.mxu0 0.0
    %170 = vmatprep.subr.mxu0 0.0
    %171 = vmatpush1.msra.mxu0 0.0
    %172 = vmatprep.subr.mxu0 0.0
    %173 = vmatpush1.msra.mxu0 0.0
    %174 = vmatprep.subr.mxu0 0.0
    %175 = vmatpush1.msra.mxu0 0.0
    %176 = vmatprep.subr.mxu0 0.0
    %177 = vmatpush1.msra.mxu0 0.0
    %178 = vmatprep.subr.mxu0 0.0
    %179 = vmatpush1.msra.mxu0 0.0
    %180 = vmatprep.subr.mxu0 0.0
    %181 = vmatpush1.msra.mxu0 0.0
    %182 = vmatprep.subr.mxu0 0.0
    %183 = vmatpush1.msra.mxu0 0.0
    %184 = vmatprep.subr.mxu0 0.0
    %185 = vmatpush1.msra.mxu0 0.0
    %186 = vmatprep.subr.mxu0 0.0
    %187 = vmatpush1.msra.mxu0 0.0
    %188 = vmatprep.subr.mxu0 0.0
    %189 = vmatpush1.msra.mxu0 0.0
    %190 = vmatprep.subr.mxu0 0.0
    %191 = vmatpush1.msra.mxu0 0.0
    %192 = vmatprep.subr.mxu0 0.0
    %193 = vmatpush1.msra.mxu0 0.0
    %194 = vmatprep.mubr.f32.mxu0 0.0
    %195 = vmatmul.mubr.f32.gmra.mrb[0].mxu0 %v122
    %v196 = vpop.f32.mrb[0].mxu0
    %v197 = vadd.f32 0.0, %v196
    %v198 = vpop.f32.mrb[0].mxu0
    %199 = vmatprep.mubr.f32.mxu0 0.0
    %200 = vmatmul.mubr.f32.gmra.mrb[0].mxu0 %v124
    %v201 = vpop.f32.mrb[0].mxu0
    %v202 = vadd.f32 0.0, %v201
    %v203 = vpop.f32.mrb[0].mxu0
    %204 = vmatprep.mubr.f32.mxu0 0.0
    %205 = vmatmul.mubr.f32.gmra.mrb[0].mxu0 %v126
    %v206 = vpop.f32.mrb[0].mxu0
    %v207 = vadd.f32 0.0, %v206
    %v208 = vpop.f32.mrb[0].mxu0
    %209 = vmatprep.mubr.f32.mxu0 0.0
    %210 = vmatmul.mubr.f32.gmra.mrb[0].mxu0 %v128
    %v211 = vpop.f32.mrb[0].mxu0
    %v212 = vadd.f32 0.0, %v211
    %v213 = vpop.f32.mrb[0].mxu0
    %214 = vdwg.mxu0
    %v215 = vsel %vm121, %v96, 0
    %v217 = vsel %vm121, %v98, 0
    %v219 = vsel %vm121, %v101, 0
    %v221 = vsel %vm121, %v103, 0
    %223 = vmatprep.subr.mxu0 0.0
    %224 = vmatpush1.msra.mxu0 %v105
    %225 = vmatprep.subr.mxu0 0.0
    %226 = vmatpush1.msra.mxu0 %v106
    %227 = vmatprep.subr.mxu0 0.0
    %228 = vmatpush1.msra.mxu0 %v107
    %229 = vmatprep.subr.mxu0 0.0
    %230 = vmatpush1.msra.mxu0 %v108
    %231 = vmatprep.subr.mxu0 0.0
    %232 = vmatpush1.msra.mxu0 %v109
    %233 = vmatprep.subr.mxu0 0.0
    %234 = vmatpush1.msra.mxu0 %v110
    %235 = vmatprep.subr.mxu0 0.0
    %236 = vmatpush1.msra.mxu0 %v111
    %237 = vmatprep.subr.mxu0 0.0
    %238 = vmatpush1.msra.mxu0 %v112
    %239 = vmatprep.subr.mxu0 0.0
    %240 = vmatpush1.msra.mxu0 0.0
    %241 = vmatprep.subr.mxu0 0.0
    %242 = vmatpush1.msra.mxu0 0.0
    %243 = vmatprep.subr.mxu0 0.0
    %244 = vmatpush1.msra.mxu0 0.0
    %245 = vmatprep.subr.mxu0 0.0
    %246 = vmatpush1.msra.mxu0 0.0
    %247 = vmatprep.subr.mxu0 0.0
    %248 = vmatpush1.msra.mxu0 0.0
    %249 = vmatprep.subr.mxu0 0.0
    %250 = vmatpush1.msra.mxu0 0.0
    %251 = vmatprep.subr.mxu0 0.0
    %252 = vmatpush1.msra.mxu0 0.0
    %253 = vmatprep.subr.mxu0 0.0
    %254 = vmatpush1.msra.mxu0 0.0
    %255 = vmatprep.subr.mxu0 0.0
    %256 = vmatpush1.msra.mxu0 0.0
    %257 = vmatprep.subr.mxu0 0.0
    %258 = vmatpush1.msra.mxu0 0.0
    %259 = vmatprep.subr.mxu0 0.0
    %260 = vmatpush1.msra.mxu0 0.0
    %261 = vmatprep.subr.mxu0 0.0
    %262 = vmatpush1.msra.mxu0 0.0
    %263 = vmatprep.subr.mxu0 0.0
    %264 = vmatpush1.msra.mxu0 0.0
    %265 = vmatprep.subr.mxu0 0.0
    %266 = vmatpush1.msra.mxu0 0.0
    %267 = vmatprep.subr.mxu0 0.0
    %268 = vmatpush1.msra.mxu0 0.0
    %269 = vmatprep.subr.mxu0 0.0
    %270 = vmatpush1.msra.mxu0 0.0
    %271 = vmatprep.subr.mxu0 0.0
    %272 = vmatpush1.msra.mxu0 0.0
    %273 = vmatprep.subr.mxu0 0.0
    %274 = vmatpush1.msra.mxu0 0.0
    %275 = vmatprep.subr.mxu0 0.0
    %276 = vmatpush1.msra.mxu0 0.0
    %277 = vmatprep.subr.mxu0 0.0
    %278 = vmatpush1.msra.mxu0 0.0
    %279 = vmatprep.subr.mxu0 0.0
    %280 = vmatpush1.msra.mxu0 0.0
    %281 = vmatprep.subr.mxu0 0.0
    %282 = vmatpush1.msra.mxu0 0.0
    %283 = vmatprep.subr.mxu0 0.0
    %284 = vmatpush1.msra.mxu0 0.0
    %285 = vmatprep.subr.mxu0 0.0
    %286 = vmatpush1.msra.mxu0 0.0
    %287 = vmatprep.mubr.f32.mxu0 0.0
    %288 = vmatmul.mubr.f32.gmra.mrb[0].mxu0 %v215
    %v289 = vpop.f32.mrb[0].mxu0
    %v290 = vadd.f32 %v197, %v289
    %v291 = vpop.f32.mrb[0].mxu0
    %292 = vmatprep.mubr.f32.mxu0 0.0
    %293 = vmatmul.mubr.f32.gmra.mrb[0].mxu0 %v217
    %v294 = vpop.f32.mrb[0].mxu0
    %v295 = vadd.f32 %v202, %v294
    %v296 = vpop.f32.mrb[0].mxu0
    %297 = vmatprep.mubr.f32.mxu0 0.0
    %298 = vmatmul.mubr.f32.gmra.mrb[0].mxu0 %v219
    %v299 = vpop.f32.mrb[0].mxu0
    %v300 = vadd.f32 %v207, %v299
    %v301 = vpop.f32.mrb[0].mxu0
    %302 = vmatprep.mubr.f32.mxu0 0.0
    %303 = vmatmul.mubr.f32.gmra.mrb[0].mxu0 %v221
    %v304 = vpop.f32.mrb[0].mxu0
    %v305 = vadd.f32 %v212, %v304
    %v306 = vpop.f32.mrb[0].mxu0
    %307 = vdwg.mxu0
    %vm308 = vcmask 1045504
    %v309 = vrot.slane %v81, 2
    %v310 = vrot.slane %v82, 2
    %v311 = vsel %vm308, %v309, %v310
    %v312 = vrot.slane %v83, 2
    %v313 = vsel %vm308, %v310, %v312
    %v314 = vrot.slane %v84, 2
    %v315 = vrot.slane %v85, 2
    %v316 = vsel %vm308, %v314, %v315
    %v317 = vrot.slane %v86, 2
    %v318 = vsel %vm308, %v315, %v317
    %s319 = scalar_lea.vmem [#allocation2], 128
    %v320 = vld [vmem:[%s319] sm:$0xff]
    %v321 = vld [vmem:[%s319 + $0x8] sm:$0xff]
    %v322 = vld [vmem:[%s319 + $0x10] sm:$0xff]
    %v323 = vld [vmem:[%s319 + $0x18] sm:$0xff]
    %v324 = vld [vmem:[%s319 + $0x20] sm:$0xff]
    %v325 = vld [vmem:[%s319 + $0x28] sm:$0xff]
    %v326 = vld [vmem:[%s319 + $0x30] sm:$0xff]
    %v327 = vld [vmem:[%s319 + $0x38] sm:$0xff]
    %v328 = vsel %vm121, %v311, 0
    %v330 = vsel %vm121, %v313, 0
    %v332 = vsel %vm121, %v316, 0
    %v334 = vsel %vm121, %v318, 0
    %336 = vmatprep.subr.mxu0 0.0
    %337 = vmatpush1.msra.mxu0 %v320
    %338 = vmatprep.subr.mxu0 0.0
    %339 = vmatpush1.msra.mxu0 %v321
    %340 = vmatprep.subr.mxu0 0.0
    %341 = vmatpush1.msra.mxu0 %v322
    %342 = vmatprep.subr.mxu0 0.0
    %343 = vmatpush1.msra.mxu0 %v323
    %344 = vmatprep.subr.mxu0 0.0
    %345 = vmatpush1.msra.mxu0 %v324
    %346 = vmatprep.subr.mxu0 0.0
    %347 = vmatpush1.msra.mxu0 %v325
    %348 = vmatprep.subr.mxu0 0.0
    %349 = vmatpush1.msra.mxu0 %v326
    %350 = vmatprep.subr.mxu0 0.0
    %351 = vmatpush1.msra.mxu0 %v327
    %352 = vmatprep.subr.mxu0 0.0
    %353 = vmatpush1.msra.mxu0 0.0
    %354 = vmatprep.subr.mxu0 0.0
    %355 = vmatpush1.msra.mxu0 0.0
    %356 = vmatprep.subr.mxu0 0.0
    %357 = vmatpush1.msra.mxu0 0.0
    %358 = vmatprep.subr.mxu0 0.0
    %359 = vmatpush1.msra.mxu0 0.0
    %360 = vmatprep.subr.mxu0 0.0
    %361 = vmatpush1.msra.mxu0 0.0
    %362 = vmatprep.subr.mxu0 0.0
    %363 = vmatpush1.msra.mxu0 0.0
    %364 = vmatprep.subr.mxu0 0.0
    %365 = vmatpush1.msra.mxu0 0.0
    %366 = vmatprep.subr.mxu0 0.0
    %367 = vmatpush1.msra.mxu0 0.0
    %368 = vmatprep.subr.mxu0 0.0
    %369 = vmatpush1.msra.mxu0 0.0
    %370 = vmatprep.subr.mxu0 0.0
    %371 = vmatpush1.msra.mxu0 0.0
    %372 = vmatprep.subr.mxu0 0.0
    %373 = vmatpush1.msra.mxu0 0.0
    %374 = vmatprep.subr.mxu0 0.0
    %375 = vmatpush1.msra.mxu0 0.0
    %376 = vmatprep.subr.mxu0 0.0
    %377 = vmatpush1.msra.mxu0 0.0
    %378 = vmatprep.subr.mxu0 0.0
    %379 = vmatpush1.msra.mxu0 0.0
    %380 = vmatprep.subr.mxu0 0.0
    %381 = vmatpush1.msra.mxu0 0.0
    %382 = vmatprep.subr.mxu0 0.0
    %383 = vmatpush1.msra.mxu0 0.0
    %384 = vmatprep.subr.mxu0 0.0
    %385 = vmatpush1.msra.mxu0 0.0
    %386 = vmatprep.subr.mxu0 0.0
    %387 = vmatpush1.msra.mxu0 0.0
    %388 = vmatprep.subr.mxu0 0.0
    %389 = vmatpush1.msra.mxu0 0.0
    %390 = vmatprep.subr.mxu0 0.0
    %391 = vmatpush1.msra.mxu0 0.0
    %392 = vmatprep.subr.mxu0 0.0
    %393 = vmatpush1.msra.mxu0 0.0
    %394 = vmatprep.subr.mxu0 0.0
    %395 = vmatpush1.msra.mxu0 0.0
    %396 = vmatprep.subr.mxu0 0.0
    %397 = vmatpush1.msra.mxu0 0.0
    %398 = vmatprep.subr.mxu0 0.0
    %399 = vmatpush1.msra.mxu0 0.0
    %400 = vmatprep.mubr.f32.mxu0 0.0
    %401 = vmatmul.mubr.f32.gmra.mrb[0].mxu0 %v328
    %v402 = vpop.f32.mrb[0].mxu0
    %v403 = vadd.f32 0.0, %v402
    %v404 = vpop.f32.mrb[0].mxu0
    %405 = vmatprep.mubr.f32.mxu0 0.0
    %406 = vmatmul.mubr.f32.gmra.mrb[0].mxu0 %v330
    %v407 = vpop.f32.mrb[0].mxu0
    %v408 = vadd.f32 0.0, %v407
    %v409 = vpop.f32.mrb[0].mxu0
    %410 = vmatprep.mubr.f32.mxu0 0.0
    %411 = vmatmul.mubr.f32.gmra.mrb[0].mxu0 %v332
    %v412 = vpop.f32.mrb[0].mxu0
    %v413 = vadd.f32 0.0, %v412
    %v414 = vpop.f32.mrb[0].mxu0
    %415 = vmatprep.mubr.f32.mxu0 0.0
    %416 = vmatmul.mubr.f32.gmra.mrb[0].mxu0 %v334
    %v417 = vpop.f32.mrb[0].mxu0
    %v418 = vadd.f32 0.0, %v417
    %v419 = vpop.f32.mrb[0].mxu0
    %420 = vdwg.mxu0
    %v421 = vadd.f32 %v290, %v403
    %v422 = vadd.f32 %v295, %v408
    %v423 = vadd.f32 %v300, %v413
    %v424 = vadd.f32 %v305, %v418
    %v425 = vld [vmem:[%s5] sm:$0x1]
    %v426 = vld [vmem:[%s5 + $0x1] sm:$0x1]
    %v427 = vadd.f32 %v421, %v422
    %v428 = vadd.f32 %v427, %v423
    %v429 = vadd.f32 %v428, %v424
    %v430 = vrot.slane %v429, 4
    %v431 = vadd.f32 %v429, %v430
    %v432 = vrot.slane %v431, 2
    %v433 = vadd.f32 %v431, %v432
    %v434 = vrot.slane %v433, 1
    %v435 = vadd.f32 %v433, %v434
    %v436 = vmul.f32 %v421, %v421
    %v437 = vmul.f32 %v422, %v422
    %v438 = vmul.f32 %v423, %v423
    %v439 = vmul.f32 %v424, %v424
    %v440 = vadd.f32 %v436, %v437
    %v441 = vadd.f32 %v440, %v438
    %v442 = vadd.f32 %v441, %v439
    %v443 = vrot.slane %v442, 4
    %v444 = vadd.f32 %v442, %v443
    %v445 = vrot.slane %v444, 2
    %v446 = vadd.f32 %v444, %v445
    %v447 = vrot.slane %v446, 1
    %v448 = vadd.f32 %v446, %v447
    %vm449 = vcmask 1040384
    %v450 = vsel %vm449, %v435, %v448
    %451 = vmatprep.subr.mxu0 0.0
    %452 = vmatpush1.msra.mxu0 %v65
    %453 = vmatprep.subr.mxu0 0.0
    %454 = vmatpush1.msra.mxu0 %v66
    %455 = vmatprep.subr.mxu0 0.0
    %456 = vmatpush1.msra.mxu0 %v67
    %457 = vmatprep.subr.mxu0 0.0
    %458 = vmatpush1.msra.mxu0 %v68
    %459 = vmatprep.subr.mxu0 0.0
    %460 = vmatpush1.msra.mxu0 %v69
    %461 = vmatprep.subr.mxu0 0.0
    %462 = vmatpush1.msra.mxu0 %v70
    %463 = vmatprep.subr.mxu0 0.0
    %464 = vmatpush1.msra.mxu0 %v71
    %465 = vmatprep.subr.mxu0 0.0
    %466 = vmatpush1.msra.mxu0 %v72
    %467 = vmatprep.subr.mxu0 0.0
    %468 = vmatpush1.msra.mxu0 %v73
    %469 = vmatprep.subr.mxu0 0.0
    %470 = vmatpush1.msra.mxu0 %v74
    %471 = vmatprep.subr.mxu0 0.0
    %472 = vmatpush1.msra.mxu0 %v75
    %473 = vmatprep.subr.mxu0 0.0
    %474 = vmatpush1.msra.mxu0 %v76
    %475 = vmatprep.subr.mxu0 0.0
    %476 = vmatpush1.msra.mxu0 %v77
    %477 = vmatprep.subr.mxu0 0.0
    %478 = vmatpush1.msra.mxu0 %v78
    %479 = vmatprep.subr.mxu0 0.0
    %480 = vmatpush1.msra.mxu0 %v79
    %481 = vmatprep.subr.mxu0 0.0
    %482 = vmatpush1.msra.mxu0 %v80
    %483 = vmatprep.subr.mxu0 0.0
    %484 = vmatpush1.msra.mxu0 0.0
    %485 = vmatprep.subr.mxu0 0.0
    %486 = vmatpush1.msra.mxu0 0.0
    %487 = vmatprep.subr.mxu0 0.0
    %488 = vmatpush1.msra.mxu0 0.0
    %489 = vmatprep.subr.mxu0 0.0
    %490 = vmatpush1.msra.mxu0 0.0
    %491 = vmatprep.subr.mxu0 0.0
    %492 = vmatpush1.msra.mxu0 0.0
    %493 = vmatprep.subr.mxu0 0.0
    %494 = vmatpush1.msra.mxu0 0.0
    %495 = vmatprep.subr.mxu0 0.0
    %496 = vmatpush1.msra.mxu0 0.0
    %497 = vmatprep.subr.mxu0 0.0
    %498 = vmatpush1.msra.mxu0 0.0
    %499 = vmatprep.subr.mxu0 0.0
    %500 = vmatpush1.msra.mxu0 0.0
    %501 = vmatprep.subr.mxu0 0.0
    %502 = vmatpush1.msra.mxu0 0.0
    %503 = vmatprep.subr.mxu0 0.0
    %504 = vmatpush1.msra.mxu0 0.0
    %505 = vmatprep.subr.mxu0 0.0
    %506 = vmatpush1.msra.mxu0 0.0
    %507 = vmatprep.subr.mxu0 0.0
    %508 = vmatpush1.msra.mxu0 0.0
    %509 = vmatprep.subr.mxu0 0.0
    %510 = vmatpush1.msra.mxu0 0.0
    %511 = vmatprep.subr.mxu0 0.0
    %512 = vmatpush1.msra.mxu0 0.0
    %513 = vmatprep.subr.mxu0 0.0
    %514 = vmatpush1.msra.mxu0 0.0
    %515 = vmatprep.mubr.f32.mxu0 0.0
    %516 = vmatmul.mubr.f32.gmra.mrb[0].mxu0 %v450
    %v517 = vpop.f32.mrb[0].mxu0
    %v518 = vadd.f32 0.0, %v517
    %v519 = vpop.f32.mrb[0].mxu0
    %520 = vdwg.mxu0
    %v521 = vmul.f32 %v518, 0.001953125
    %v522 = vmul.f32 %v521, %v521
    %v524 = vrot.slane %v522, 7
    %v526 = vsub.f32 %v521, %v524
    %v527 = vadd.f32 %v526, 1e-05
    %v528 = vrsqrt.pop %v527
    %v530 = vrot.slane %v528, 1
    %v532 = vmul.f32 %v425, %v530
    %v533 = vmul.f32 %v521, %v532
    %v534 = vsub.f32 %v426, %v533
    %v535 = vlaneseq
    %v536 = vshrl.u32 %v535, 7
    %v537 = vsub.s32 0, %v536
    %v538 = vrot.slane %v532, %v537
    %v539 = vmul.f32 %v421, %v538
    %v540 = vmul.f32 %v422, %v538
    %v541 = vmul.f32 %v423, %v538
    %v542 = vmul.f32 %v424, %v538
    %v543 = vlaneseq
    %v544 = vshrl.u32 %v543, 7
    %v545 = vsub.s32 0, %v544
    %v546 = vrot.slane %v534, %v545
    %v547 = vadd.f32 %v539, %v546
    %v548 = vadd.f32 %v540, %v546
    %v549 = vadd.f32 %v541, %v546
    %v550 = vadd.f32 %v542, %v546
    %v551 = vmax.f32 %v547, 0.0
    %v552 = vmax.f32 %v548, 0.0
    %v553 = vmax.f32 %v549, 0.0
    %v554 = vmax.f32 %v550, 0.0
    %v555 = vlaneseq
    %v556 = vshrl.u32 %v555, 7
    %v557 = vadd.s32 %v556, 8
    %v558 = vadd.s32 %v556, 16
    %v559 = vadd.s32 %v556, 24
    %vm560 = vcmp.lt.s32.totalorder %v556, 0
    %v561 = vsub.s32 0, %v556
    %v562 = vsel %vm560, %v561, %v556
    %v563 = vshrl.u32 %v562, 4
    %v564 = vand.u32 %v562, 15
    %v565 = vsub.s32 0, %v564
    %v566 = vsel %vm560, %v565, %v564
    %vm567 = vcmp.lt.s32.totalorder %v557, 0
    %v568 = vsub.s32 0, %v557
    %v569 = vsel %vm567, %v568, %v557
    %v570 = vshrl.u32 %v569, 4
    %v571 = vand.u32 %v569, 15
    %v572 = vsub.s32 0, %v571
    %v573 = vsel %vm567, %v572, %v571
    %vm574 = vcmp.lt.s32.totalorder %v558, 0
    %v575 = vsub.s32 0, %v558
    %v576 = vsel %vm574, %v575, %v558
    %v577 = vshrl.u32 %v576, 4
    %v578 = vand.u32 %v576, 15
    %v579 = vsub.s32 0, %v578
    %v580 = vsel %vm574, %v579, %v578
    %vm581 = vcmp.lt.s32.totalorder %v559, 0
    %v582 = vsub.s32 0, %v559
    %v583 = vsel %vm581, %v582, %v559
    %v584 = vshrl.u32 %v583, 4
    %v585 = vand.u32 %v583, 15
    %v586 = vsub.s32 0, %v585
    %v587 = vsel %vm581, %v586, %v585
    %vm588 = vcmp.ne.s32.totalorder %v566, 0
    %vm589 = vcmp.ne.s32.totalorder %v573, 0
    %vm590 = vcmp.ne.s32.totalorder %v580, 0
    %vm591 = vcmp.ne.s32.totalorder %v587, 0
    %vm592 = vcmp.lt.s32.totalorder %v566, 0
    %vm593 = vcmp.lt.s32.totalorder %v573, 0
    %vm594 = vcmp.lt.s32.totalorder %v580, 0
    %vm595 = vcmp.lt.s32.totalorder %v587, 0
    %vm596 = vmand %vm592, %vm588
    %vm597 = vmand %vm593, %vm589
    %vm598 = vmand %vm594, %vm590
    %vm599 = vmand %vm595, %vm591
    %v600 = vadd.s32 %v566, 16
    %v601 = vadd.s32 %v573, 16
    %v602 = vadd.s32 %v580, 16
    %v603 = vadd.s32 %v587, 16
    %v604 = vsel %vm596, %v600, %v566
    %v605 = vsel %vm597, %v601, %v573
    %v606 = vsel %vm598, %v602, %v580
    %v607 = vsel %vm599, %v603, %v587
    %vm608 = vcmp.eq.s32.totalorder %v604, 0
    %vm609 = vcmp.eq.s32.totalorder %v605, 0
    %vm610 = vcmp.eq.s32.totalorder %v606, 0
    %vm611 = vcmp.eq.s32.totalorder %v607, 0
    %v616 = vrot.slane %v551, 7
    %v617 = vrot.slane %v552, 7
    %v618 = vsel %vm449, %v616, %v617
    %v619 = vrot.slane %v553, 7
    %v620 = vsel %vm449, %v617, %v619
    %v621 = vrot.slane %v554, 7
    %v622 = vsel %vm449, %v619, %v621
    %v627 = vsel %vm449, 0.0, %v616
    %v628 = vsel %vm608, 1, 0
    %v629 = vsel %vm609, 1, 0
    %v630 = vsel %vm610, 1, 0
    %v631 = vsel %vm611, 1, 0
    %vm632 = vcmp.eq.s32.totalorder %v628, 1
    %vm633 = vcmp.eq.s32.totalorder %v629, 1
    %vm634 = vcmp.eq.s32.totalorder %v630, 1
    %vm635 = vcmp.eq.s32.totalorder %v631, 1
    %v636 = vsel %vm632, 0.0, %v627
    %v637 = vsel %vm633, 0.0, %v618
    %v638 = vsel %vm634, 0.0, %v620
    %v639 = vsel %vm635, 0.0, %v622
    %vm640 = vcmp.eq.s32.totalorder %v604, 15
    %vm641 = vcmp.eq.s32.totalorder %v605, 15
    %vm642 = vcmp.eq.s32.totalorder %v606, 15
    %vm643 = vcmp.eq.s32.totalorder %v607, 15
    %v644 = vrot.slane %v551, 1
    %v645 = vrot.slane %v552, 1
    %v646 = vsel %vm93, %v644, %v645
    %v647 = vrot.slane %v553, 1
    %v648 = vsel %vm93, %v645, %v647
    %v649 = vrot.slane %v554, 1
    %v650 = vsel %vm93, %v647, %v649
    %v655 = vsel %vm93, %v649, 0.0
    %v656 = vsel %vm640, 1, 0
    %v657 = vsel %vm641, 1, 0
    %v658 = vsel %vm642, 1, 0
    %v659 = vsel %vm643, 1, 0
    %vm660 = vcmp.eq.s32.totalorder %v656, 1
    %vm661 = vcmp.eq.s32.totalorder %v657, 1
    %vm662 = vcmp.eq.s32.totalorder %v658, 1
    %vm663 = vcmp.eq.s32.totalorder %v659, 1
    %v664 = vsel %vm660, 0.0, %v646
    %v665 = vsel %vm661, 0.0, %v648
    %v666 = vsel %vm662, 0.0, %v650
    %v667 = vsel %vm663, 0.0, %v655
    %s668 = scalar_lea.vmem [#allocation5], 128
    %v669 = vld [vmem:[%s668] sm:$0xff]
    %v670 = vld [vmem:[%s668 + $0x8] sm:$0xff]
    %v671 = vld [vmem:[%s668 + $0x10] sm:$0xff]
    %v672 = vld [vmem:[%s668 + $0x18] sm:$0xff]
    %v673 = vld [vmem:[%s668 + $0x20] sm:$0xff]
    %v674 = vld [vmem:[%s668 + $0x28] sm:$0xff]
    %v675 = vld [vmem:[%s668 + $0x30] sm:$0xff]
    %v676 = vld [vmem:[%s668 + $0x38] sm:$0xff]
    %v677 = vld [vmem:[%s668 + $0x40] sm:$0xff]
    %v678 = vld [vmem:[%s668 + $0x48] sm:$0xff]
    %v679 = vld [vmem:[%s668 + $0x50] sm:$0xff]
    %v680 = vld [vmem:[%s668 + $0x58] sm:$0xff]
    %v681 = vld [vmem:[%s668 + $0x60] sm:$0xff]
    %v682 = vld [vmem:[%s668 + $0x68] sm:$0xff]
    %v683 = vld [vmem:[%s668 + $0x70] sm:$0xff]
    %v684 = vld [vmem:[%s668 + $0x78] sm:$0xff]
    %v685 = vld [vmem:[#allocation5] sm:$0xff]
    %v686 = vld [vmem:[#allocation5 + $0x8] sm:$0xff]
    %v687 = vld [vmem:[#allocation5 + $0x10] sm:$0xff]
    %v688 = vld [vmem:[#allocation5 + $0x18] sm:$0xff]
    %v689 = vld [vmem:[#allocation5 + $0x20] sm:$0xff]
    %v690 = vld [vmem:[#allocation5 + $0x28] sm:$0xff]
    %v691 = vld [vmem:[#allocation5 + $0x30] sm:$0xff]
    %v692 = vld [vmem:[#allocation5 + $0x38] sm:$0xff]
    %v693 = vld [vmem:[#allocation5 + $0x40] sm:$0xff]
    %v694 = vld [vmem:[#allocation5 + $0x48] sm:$0xff]
    %v695 = vld [vmem:[#allocation5 + $0x50] sm:$0xff]
    %v696 = vld [vmem:[#allocation5 + $0x58] sm:$0xff]
    %v697 = vld [vmem:[#allocation5 + $0x60] sm:$0xff]
    %v698 = vld [vmem:[#allocation5 + $0x68] sm:$0xff]
    %v699 = vld [vmem:[#allocation5 + $0x70] sm:$0xff]
    %v700 = vld [vmem:[#allocation5 + $0x78] sm:$0xff]
    %701 = vmatprep.subr.mxu0 0.0
    %702 = vmatpush1.msra.mxu0 %v685
    %703 = vmatprep.subr.mxu0 0.0
    %704 = vmatpush1.msra.mxu0 %v686
    %705 = vmatprep.subr.mxu0 0.0
    %706 = vmatpush1.msra.mxu0 %v687
    %707 = vmatprep.subr.mxu0 0.0
    %708 = vmatpush1.msra.mxu0 %v688
    %709 = vmatprep.subr.mxu0 0.0
    %710 = vmatpush1.msra.mxu0 %v689
    %711 = vmatprep.subr.mxu0 0.0
    %712 = vmatpush1.msra.mxu0 %v690
    %713 = vmatprep.subr.mxu0 0.0
    %714 = vmatpush1.msra.mxu0 %v691
    %715 = vmatprep.subr.mxu0 0.0
    %716 = vmatpush1.msra.mxu0 %v692
    %717 = vmatprep.subr.mxu0 0.0
    %718 = vmatpush1.msra.mxu0 %v693
    %719 = vmatprep.subr.mxu0 0.0
    %720 = vmatpush1.msra.mxu0 %v694
    %721 = vmatprep.subr.mxu0 0.0
    %722 = vmatpush1.msra.mxu0 %v695
    %723 = vmatprep.subr.mxu0 0.0
    %724 = vmatpush1.msra.mxu0 %v696
    %725 = vmatprep.subr.mxu0 0.0
    %726 = vmatpush1.msra.mxu0 %v697
    %727 = vmatprep.subr.mxu0 0.0
    %728 = vmatpush1.msra.mxu0 %v698
    %729 = vmatprep.subr.mxu0 0.0
    %730 = vmatpush1.msra.mxu0 %v699
    %731 = vmatprep.subr.mxu0 0.0
    %732 = vmatpush1.msra.mxu0 %v700
    %733 = vmatprep.subr.mxu0 0.0
    %734 = vmatpush1.msra.mxu0 0.0
    %735 = vmatprep.subr.mxu0 0.0
    %736 = vmatpush1.msra.mxu0 0.0
    %737 = vmatprep.subr.mxu0 0.0
    %738 = vmatpush1.msra.mxu0 0.0
    %739 = vmatprep.subr.mxu0 0.0
    %740 = vmatpush1.msra.mxu0 0.0
    %741 = vmatprep.subr.mxu0 0.0
    %742 = vmatpush1.msra.mxu0 0.0
    %743 = vmatprep.subr.mxu0 0.0
    %744 = vmatpush1.msra.mxu0 0.0
    %745 = vmatprep.subr.mxu0 0.0
    %746 = vmatpush1.msra.mxu0 0.0
    %747 = vmatprep.subr.mxu0 0.0
    %748 = vmatpush1.msra.mxu0 0.0
    %749 = vmatprep.subr.mxu0 0.0
    %750 = vmatpush1.msra.mxu0 0.0
    %751 = vmatprep.subr.mxu0 0.0
    %752 = vmatpush1.msra.mxu0 0.0
    %753 = vmatprep.subr.mxu0 0.0
    %754 = vmatpush1.msra.mxu0 0.0
    %755 = vmatprep.subr.mxu0 0.0
    %756 = vmatpush1.msra.mxu0 0.0
    %757 = vmatprep.subr.mxu0 0.0
    %758 = vmatpush1.msra.mxu0 0.0
    %759 = vmatprep.subr.mxu0 0.0
    %760 = vmatpush1.msra.mxu0 0.0
    %761 = vmatprep.subr.mxu0 0.0
    %762 = vmatpush1.msra.mxu0 0.0
    %763 = vmatprep.subr.mxu0 0.0
    %764 = vmatpush1.msra.mxu0 0.0
    %765 = vmatprep.mubr.f32.mxu0 0.0
    %766 = vmatmul.mubr.f32.gmra.mrb[0].mxu0 %v636
    %v767 = vpop.f32.mrb[0].mxu0
    %v768 = vadd.f32 0.0, %v767
    %v769 = vpop.f32.mrb[0].mxu0
    %770 = vmatprep.mubr.f32.mxu0 0.0
    %771 = vmatmul.mubr.f32.gmra.mrb[0].mxu0 %v637
    %v772 = vpop.f32.mrb[0].mxu0
    %v773 = vadd.f32 0.0, %v772
    %v774 = vpop.f32.mrb[0].mxu0
    %775 = vmatprep.mubr.f32.mxu0 0.0
    %776 = vmatmul.mubr.f32.gmra.mrb[0].mxu0 %v638
    %v777 = vpop.f32.mrb[0].mxu0
    %v778 = vadd.f32 0.0, %v777
    %v779 = vpop.f32.mrb[0].mxu0
    %780 = vmatprep.mubr.f32.mxu0 0.0
    %781 = vmatmul.mubr.f32.gmra.mrb[0].mxu0 %v639
    %v782 = vpop.f32.mrb[0].mxu0
    %v783 = vadd.f32 0.0, %v782
    %v784 = vpop.f32.mrb[0].mxu0
    %785 = vdwg.mxu0
    %786 = vmatprep.subr.mxu0 0.0
    %787 = vmatpush1.msra.mxu0 %v669
    %788 = vmatprep.subr.mxu0 0.0
    %789 = vmatpush1.msra.mxu0 %v670
    %790 = vmatprep.subr.mxu0 0.0
    %791 = vmatpush1.msra.mxu0 %v671
    %792 = vmatprep.subr.mxu0 0.0
    %793 = vmatpush1.msra.mxu0 %v672
    %794 = vmatprep.subr.mxu0 0.0
    %795 = vmatpush1.msra.mxu0 %v673
    %796 = vmatprep.subr.mxu0 0.0
    %797 = vmatpush1.msra.mxu0 %v674
    %798 = vmatprep.subr.mxu0 0.0
    %799 = vmatpush1.msra.mxu0 %v675
    %800 = vmatprep.subr.mxu0 0.0
    %801 = vmatpush1.msra.mxu0 %v676
    %802 = vmatprep.subr.mxu0 0.0
    %803 = vmatpush1.msra.mxu0 %v677
    %804 = vmatprep.subr.mxu0 0.0
    %805 = vmatpush1.msra.mxu0 %v678
    %806 = vmatprep.subr.mxu0 0.0
    %807 = vmatpush1.msra.mxu0 %v679
    %808 = vmatprep.subr.mxu0 0.0
    %809 = vmatpush1.msra.mxu0 %v680
    %810 = vmatprep.subr.mxu0 0.0
    %811 = vmatpush1.msra.mxu0 %v681
    %812 = vmatprep.subr.mxu0 0.0
    %813 = vmatpush1.msra.mxu0 %v682
    %814 = vmatprep.subr.mxu0 0.0
    %815 = vmatpush1.msra.mxu0 %v683
    %816 = vmatprep.subr.mxu0 0.0
    %817 = vmatpush1.msra.mxu0 %v684
    %818 = vmatprep.subr.mxu0 0.0
    %819 = vmatpush1.msra.mxu0 0.0
    %820 = vmatprep.subr.mxu0 0.0
    %821 = vmatpush1.msra.mxu0 0.0
    %822 = vmatprep.subr.mxu0 0.0
    %823 = vmatpush1.msra.mxu0 0.0
    %824 = vmatprep.subr.mxu0 0.0
    %825 = vmatpush1.msra.mxu0 0.0
    %826 = vmatprep.subr.mxu0 0.0
    %827 = vmatpush1.msra.mxu0 0.0
    %828 = vmatprep.subr.mxu0 0.0
    %829 = vmatpush1.msra.mxu0 0.0
    %830 = vmatprep.subr.mxu0 0.0
    %831 = vmatpush1.msra.mxu0 0.0
    %832 = vmatprep.subr.mxu0 0.0
    %833 = vmatpush1.msra.mxu0 0.0
    %834 = vmatprep.subr.mxu0 0.0
    %835 = vmatpush1.msra.mxu0 0.0
    %836 = vmatprep.subr.mxu0 0.0
    %837 = vmatpush1.msra.mxu0 0.0
    %838 = vmatprep.subr.mxu0 0.0
    %839 = vmatpush1.msra.mxu0 0.0
    %840 = vmatprep.subr.mxu0 0.0
    %841 = vmatpush1.msra.mxu0 0.0
    %842 = vmatprep.subr.mxu0 0.0
    %843 = vmatpush1.msra.mxu0 0.0
    %844 = vmatprep.subr.mxu0 0.0
    %845 = vmatpush1.msra.mxu0 0.0
    %846 = vmatprep.subr.mxu0 0.0
    %847 = vmatpush1.msra.mxu0 0.0
    %848 = vmatprep.subr.mxu0 0.0
    %849 = vmatpush1.msra.mxu0 0.0
    %850 = vmatprep.mubr.f32.mxu0 0.0
    %851 = vmatmul.mubr.f32.gmra.mrb[0].mxu0 %v551
    %v852 = vpop.f32.mrb[0].mxu0
    %v853 = vadd.f32 %v768, %v852
    %v854 = vpop.f32.mrb[0].mxu0
    %855 = vmatprep.mubr.f32.mxu0 0.0
    %856 = vmatmul.mubr.f32.gmra.mrb[0].mxu0 %v552
    %v857 = vpop.f32.mrb[0].mxu0
    %v858 = vadd.f32 %v773, %v857
    %v859 = vpop.f32.mrb[0].mxu0
    %860 = vmatprep.mubr.f32.mxu0 0.0
    %861 = vmatmul.mubr.f32.gmra.mrb[0].mxu0 %v553
    %v862 = vpop.f32.mrb[0].mxu0
    %v863 = vadd.f32 %v778, %v862
    %v864 = vpop.f32.mrb[0].mxu0
    %865 = vmatprep.mubr.f32.mxu0 0.0
    %866 = vmatmul.mubr.f32.gmra.mrb[0].mxu0 %v554
    %v867 = vpop.f32.mrb[0].mxu0
    %v868 = vadd.f32 %v783, %v867
    %v869 = vpop.f32.mrb[0].mxu0
    %870 = vdwg.mxu0
    %s871 = scalar_lea.vmem [#allocation5], 256
    %v872 = vld [vmem:[%s871] sm:$0xff]
    %v873 = vld [vmem:[%s871 + $0x8] sm:$0xff]
    %v874 = vld [vmem:[%s871 + $0x10] sm:$0xff]
    %v875 = vld [vmem:[%s871 + $0x18] sm:$0xff]
    %v876 = vld [vmem:[%s871 + $0x20] sm:$0xff]
    %v877 = vld [vmem:[%s871 + $0x28] sm:$0xff]
    %v878 = vld [vmem:[%s871 + $0x30] sm:$0xff]
    %v879 = vld [vmem:[%s871 + $0x38] sm:$0xff]
    %v880 = vld [vmem:[%s871 + $0x40] sm:$0xff]
    %v881 = vld [vmem:[%s871 + $0x48] sm:$0xff]
    %v882 = vld [vmem:[%s871 + $0x50] sm:$0xff]
    %v883 = vld [vmem:[%s871 + $0x58] sm:$0xff]
    %v884 = vld [vmem:[%s871 + $0x60] sm:$0xff]
    %v885 = vld [vmem:[%s871 + $0x68] sm:$0xff]
    %v886 = vld [vmem:[%s871 + $0x70] sm:$0xff]
    %v887 = vld [vmem:[%s871 + $0x78] sm:$0xff]
    %888 = vmatprep.subr.mxu0 0.0
    %889 = vmatpush1.msra.mxu0 %v872
    %890 = vmatprep.subr.mxu0 0.0
    %891 = vmatpush1.msra.mxu0 %v873
    %892 = vmatprep.subr.mxu0 0.0
    %893 = vmatpush1.msra.mxu0 %v874
    %894 = vmatprep.subr.mxu0 0.0
    %895 = vmatpush1.msra.mxu0 %v875
    %896 = vmatprep.subr.mxu0 0.0
    %897 = vmatpush1.msra.mxu0 %v876
    %898 = vmatprep.subr.mxu0 0.0
    %899 = vmatpush1.msra.mxu0 %v877
    %900 = vmatprep.subr.mxu0 0.0
    %901 = vmatpush1.msra.mxu0 %v878
    %902 = vmatprep.subr.mxu0 0.0
    %903 = vmatpush1.msra.mxu0 %v879
    %904 = vmatprep.subr.mxu0 0.0
    %905 = vmatpush1.msra.mxu0 %v880
    %906 = vmatprep.subr.mxu0 0.0
    %907 = vmatpush1.msra.mxu0 %v881
    %908 = vmatprep.subr.mxu0 0.0
    %909 = vmatpush1.msra.mxu0 %v882
    %910 = vmatprep.subr.mxu0 0.0
    %911 = vmatpush1.msra.mxu0 %v883
    %912 = vmatprep.subr.mxu0 0.0
    %913 = vmatpush1.msra.mxu0 %v884
    %914 = vmatprep.subr.mxu0 0.0
    %915 = vmatpush1.msra.mxu0 %v885
    %916 = vmatprep.subr.mxu0 0.0
    %917 = vmatpush1.msra.mxu0 %v886
    %918 = vmatprep.subr.mxu0 0.0
    %919 = vmatpush1.msra.mxu0 %v887
    %920 = vmatprep.subr.mxu0 0.0
    %921 = vmatpush1.msra.mxu0 0.0
    %922 = vmatprep.subr.mxu0 0.0
    %923 = vmatpush1.msra.mxu0 0.0
    %924 = vmatprep.subr.mxu0 0.0
    %925 = vmatpush1.msra.mxu0 0.0
    %926 = vmatprep.subr.mxu0 0.0
    %927 = vmatpush1.msra.mxu0 0.0
    %928 = vmatprep.subr.mxu0 0.0
    %929 = vmatpush1.msra.mxu0 0.0
    %930 = vmatprep.subr.mxu0 0.0
    %931 = vmatpush1.msra.mxu0 0.0
    %932 = vmatprep.subr.mxu0 0.0
    %933 = vmatpush1.msra.mxu0 0.0
    %934 = vmatprep.subr.mxu0 0.0
    %935 = vmatpush1.msra.mxu0 0.0
    %936 = vmatprep.subr.mxu0 0.0
    %937 = vmatpush1.msra.mxu0 0.0
    %938 = vmatprep.subr.mxu0 0.0
    %939 = vmatpush1.msra.mxu0 0.0
    %940 = vmatprep.subr.mxu0 0.0
    %941 = vmatpush1.msra.mxu0 0.0
    %942 = vmatprep.subr.mxu0 0.0
    %943 = vmatpush1.msra.mxu0 0.0
    %944 = vmatprep.subr.mxu0 0.0
    %945 = vmatpush1.msra.mxu0 0.0
    %946 = vmatprep.subr.mxu0 0.0
    %947 = vmatpush1.msra.mxu0 0.0
    %948 = vmatprep.subr.mxu0 0.0
    %949 = vmatpush1.msra.mxu0 0.0
    %950 = vmatprep.subr.mxu0 0.0
    %951 = vmatpush1.msra.mxu0 0.0
    %952 = vmatprep.mubr.f32.mxu0 0.0
    %953 = vmatmul.mubr.f32.gmra.mrb[0].mxu0 %v664
    %v954 = vpop.f32.mrb[0].mxu0
    %v955 = vadd.f32 0.0, %v954
    %v956 = vpop.f32.mrb[0].mxu0
    %957 = vmatprep.mubr.f32.mxu0 0.0
    %958 = vmatmul.mubr.f32.gmra.mrb[0].mxu0 %v665
    %v959 = vpop.f32.mrb[0].mxu0
    %v960 = vadd.f32 0.0, %v959
    %v961 = vpop.f32.mrb[0].mxu0
    %962 = vmatprep.mubr.f32.mxu0 0.0
    %963 = vmatmul.mubr.f32.gmra.mrb[0].mxu0 %v666
    %v964 = vpop.f32.mrb[0].mxu0
    %v965 = vadd.f32 0.0, %v964
    %v966 = vpop.f32.mrb[0].mxu0
    %967 = vmatprep.mubr.f32.mxu0 0.0
    %968 = vmatmul.mubr.f32.gmra.mrb[0].mxu0 %v667
    %v969 = vpop.f32.mrb[0].mxu0
    %v970 = vadd.f32 0.0, %v969
    %v971 = vpop.f32.mrb[0].mxu0
    %972 = vdwg.mxu0
    %v973 = vadd.f32 %v853, %v955
    %v974 = vadd.f32 %v858, %v960
    %v975 = vadd.f32 %v863, %v965
    %v976 = vadd.f32 %v868, %v970
    %v977 = vld [vmem:[%s5 + $0x2] sm:$0x1]
    %v978 = vld [vmem:[%s5 + $0x3] sm:$0x1]
    %v979 = vadd.f32 %v973, %v974
    %v980 = vadd.f32 %v979, %v975
    %v981 = vadd.f32 %v980, %v976
    %v982 = vrot.slane %v981, 4
    %v983 = vadd.f32 %v981, %v982
    %v984 = vrot.slane %v983, 2
    %v985 = vadd.f32 %v983, %v984
    %v986 = vrot.slane %v985, 1
    %v987 = vadd.f32 %v985, %v986
    %v988 = vmul.f32 %v973, %v973
    %v989 = vmul.f32 %v974, %v974
    %v990 = vmul.f32 %v975, %v975
    %v991 = vmul.f32 %v976, %v976
    %v992 = vadd.f32 %v988, %v989
    %v993 = vadd.f32 %v992, %v990
    %v994 = vadd.f32 %v993, %v991
    %v995 = vrot.slane %v994, 4
    %v996 = vadd.f32 %v994, %v995
    %v997 = vrot.slane %v996, 2
    %v998 = vadd.f32 %v996, %v997
    %v999 = vrot.slane %v998, 1
    %v1000 = vadd.f32 %v998, %v999
    %v1001 = vsel %vm449, %v987, %v1000
    %1002 = vmatprep.subr.mxu0 0.0
    %1003 = vmatpush1.msra.mxu0 %v65
    %1004 = vmatprep.subr.mxu0 0.0
    %1005 = vmatpush1.msra.mxu0 %v66
    %1006 = vmatprep.subr.mxu0 0.0
    %1007 = vmatpush1.msra.mxu0 %v67
    %1008 = vmatprep.subr.mxu0 0.0
    %1009 = vmatpush1.msra.mxu0 %v68
    %1010 = vmatprep.subr.mxu0 0.0
    %1011 = vmatpush1.msra.mxu0 %v69
    %1012 = vmatprep.subr.mxu0 0.0
    %1013 = vmatpush1.msra.mxu0 %v70
    %1014 = vmatprep.subr.mxu0 0.0
    %1015 = vmatpush1.msra.mxu0 %v71
    %1016 = vmatprep.subr.mxu0 0.0
    %1017 = vmatpush1.msra.mxu0 %v72
    %1018 = vmatprep.subr.mxu0 0.0
    %1019 = vmatpush1.msra.mxu0 %v73
    %1020 = vmatprep.subr.mxu0 0.0
    %1021 = vmatpush1.msra.mxu0 %v74
    %1022 = vmatprep.subr.mxu0 0.0
    %1023 = vmatpush1.msra.mxu0 %v75
    %1024 = vmatprep.subr.mxu0 0.0
    %1025 = vmatpush1.msra.mxu0 %v76
    %1026 = vmatprep.subr.mxu0 0.0
    %1027 = vmatpush1.msra.mxu0 %v77
    %1028 = vmatprep.subr.mxu0 0.0
    %1029 = vmatpush1.msra.mxu0 %v78
    %1030 = vmatprep.subr.mxu0 0.0
    %1031 = vmatpush1.msra.mxu0 %v79
    %1032 = vmatprep.subr.mxu0 0.0
    %1033 = vmatpush1.msra.mxu0 %v80
    %1034 = vmatprep.subr.mxu0 0.0
    %1035 = vmatpush1.msra.mxu0 0.0
    %1036 = vmatprep.subr.mxu0 0.0
    %1037 = vmatpush1.msra.mxu0 0.0
    %1038 = vmatprep.subr.mxu0 0.0
    %1039 = vmatpush1.msra.mxu0 0.0
    %1040 = vmatprep.subr.mxu0 0.0
    %1041 = vmatpush1.msra.mxu0 0.0
    %1042 = vmatprep.subr.mxu0 0.0
    %1043 = vmatpush1.msra.mxu0 0.0
    %1044 = vmatprep.subr.mxu0 0.0
    %1045 = vmatpush1.msra.mxu0 0.0
    %1046 = vmatprep.subr.mxu0 0.0
    %1047 = vmatpush1.msra.mxu0 0.0
    %1048 = vmatprep.subr.mxu0 0.0
    %1049 = vmatpush1.msra.mxu0 0.0
    %1050 = vmatprep.subr.mxu0 0.0
    %1051 = vmatpush1.msra.mxu0 0.0
    %1052 = vmatprep.subr.mxu0 0.0
    %1053 = vmatpush1.msra.mxu0 0.0
    %1054 = vmatprep.subr.mxu0 0.0
    %1055 = vmatpush1.msra.mxu0 0.0
    %1056 = vmatprep.subr.mxu0 0.0
    %1057 = vmatpush1.msra.mxu0 0.0
    %1058 = vmatprep.subr.mxu0 0.0
    %1059 = vmatpush1.msra.mxu0 0.0
    %1060 = vmatprep.subr.mxu0 0.0
    %1061 = vmatpush1.msra.mxu0 0.0
    %1062 = vmatprep.subr.mxu0 0.0
    %1063 = vmatpush1.msra.mxu0 0.0
    %1064 = vmatprep.subr.mxu0 0.0
    %1065 = vmatpush1.msra.mxu0 0.0
    %1066 = vmatprep.mubr.f32.mxu0 0.0
    %1067 = vmatmul.mubr.f32.gmra.mrb[0].mxu0 %v1001
    %v1068 = vpop.f32.mrb[0].mxu0
    %v1069 = vadd.f32 0.0, %v1068
    %v1070 = vpop.f32.mrb[0].mxu0
    %1071 = vdwg.mxu0
    %v1072 = vmul.f32 %v1069, 0.001953125
    %v1073 = vmul.f32 %v1072, %v1072
    %v1075 = vrot.slane %v1073, 7
    %v1077 = vsub.f32 %v1072, %v1075
    %v1078 = vadd.f32 %v1077, 1e-05
    %v1079 = vrsqrt.pop %v1078
    %v1081 = vrot.slane %v1079, 1
    %v1083 = vmul.f32 %v977, %v1081
    %v1084 = vmul.f32 %v1072, %v1083
    %v1085 = vsub.f32 %v978, %v1084
    %v1086 = vlaneseq
    %v1087 = vshrl.u32 %v1086, 7
    %v1088 = vsub.s32 0, %v1087
    %v1089 = vrot.slane %v1083, %v1088
    %v1090 = vmul.f32 %v973, %v1089
    %v1091 = vmul.f32 %v974, %v1089
    %v1092 = vmul.f32 %v975, %v1089
    %v1093 = vmul.f32 %v976, %v1089
    %v1094 = vlaneseq
    %v1095 = vshrl.u32 %v1094, 7
    %v1096 = vsub.s32 0, %v1095
    %v1097 = vrot.slane %v1085, %v1096
    %v1098 = vadd.f32 %v1090, %v1097
    %v1099 = vadd.f32 %v1091, %v1097
    %v1100 = vadd.f32 %v1092, %v1097
    %v1101 = vadd.f32 %v1093, %v1097
    %v1102 = vmax.f32 %v1098, 0.0
    %v1103 = vmax.f32 %v1099, 0.0
    %v1104 = vmax.f32 %v1100, 0.0
    %v1105 = vmax.f32 %v1101, 0.0
    %v1106 = vld [vmem:[%s3] sm:$0xff]
    %v1107 = vld [vmem:[%s3 + $0x8] sm:$0xff]
    %v1108 = vld [vmem:[%s3 + $0x10] sm:$0xff]
    %v1109 = vld [vmem:[%s3 + $0x18] sm:$0xff]
    %v1110 = vld [vmem:[%s3 + $0x20] sm:$0xff]
    %v1111 = vld [vmem:[%s3 + $0x28] sm:$0xff]
    %v1112 = vld [vmem:[%s3 + $0x30] sm:$0xff]
    %v1113 = vld [vmem:[%s3 + $0x38] sm:$0xff]
    %1114 = vmatprep.subr.mxu0 0.0
    %1115 = vmatpush1.msra.mxu0 %v1106
    %1116 = vmatprep.subr.mxu0 0.0
    %1117 = vmatpush1.msra.mxu0 %v1107
    %1118 = vmatprep.subr.mxu0 0.0
    %1119 = vmatpush1.msra.mxu0 %v1108
    %1120 = vmatprep.subr.mxu0 0.0
    %1121 = vmatpush1.msra.mxu0 %v1109
    %1122 = vmatprep.subr.mxu0 0.0
    %1123 = vmatpush1.msra.mxu0 %v1110
    %1124 = vmatprep.subr.mxu0 0.0
    %1125 = vmatpush1.msra.mxu0 %v1111
    %1126 = vmatprep.subr.mxu0 0.0
    %1127 = vmatpush1.msra.mxu0 %v1112
    %1128 = vmatprep.subr.mxu0 0.0
    %1129 = vmatpush1.msra.mxu0 %v1113
    %1130 = vmatprep.subr.mxu0 0.0
    %1131 = vmatpush1.msra.mxu0 0.0
    %1132 = vmatprep.subr.mxu0 0.0
    %1133 = vmatpush1.msra.mxu0 0.0
    %1134 = vmatprep.subr.mxu0 0.0
    %1135 = vmatpush1.msra.mxu0 0.0
    %1136 = vmatprep.subr.mxu0 0.0
    %1137 = vmatpush1.msra.mxu0 0.0
    %1138 = vmatprep.subr.mxu0 0.0
    %1139 = vmatpush1.msra.mxu0 0.0
    %1140 = vmatprep.subr.mxu0 0.0
    %1141 = vmatpush1.msra.mxu0 0.0
    %1142 = vmatprep.subr.mxu0 0.0
    %1143 = vmatpush1.msra.mxu0 0.0
    %1144 = vmatprep.subr.mxu0 0.0
    %1145 = vmatpush1.msra.mxu0 0.0
    %1146 = vmatprep.subr.mxu0 0.0
    %1147 = vmatpush1.msra.mxu0 0.0
    %1148 = vmatprep.subr.mxu0 0.0
    %1149 = vmatpush1.msra.mxu0 0.0
    %1150 = vmatprep.subr.mxu0 0.0
    %1151 = vmatpush1.msra.mxu0 0.0
    %1152 = vmatprep.subr.mxu0 0.0
    %1153 = vmatpush1.msra.mxu0 0.0
    %1154 = vmatprep.subr.mxu0 0.0
    %1155 = vmatpush1.msra.mxu0 0.0
    %1156 = vmatprep.subr.mxu0 0.0
    %1157 = vmatpush1.msra.mxu0 0.0
    %1158 = vmatprep.subr.mxu0 0.0
    %1159 = vmatpush1.msra.mxu0 0.0
    %1160 = vmatprep.subr.mxu0 0.0
    %1161 = vmatpush1.msra.mxu0 0.0
    %1162 = vmatprep.subr.mxu0 0.0
    %1163 = vmatpush1.msra.mxu0 0.0
    %1164 = vmatprep.subr.mxu0 0.0
    %1165 = vmatpush1.msra.mxu0 0.0
    %1166 = vmatprep.subr.mxu0 0.0
    %1167 = vmatpush1.msra.mxu0 0.0
    %1168 = vmatprep.subr.mxu0 0.0
    %1169 = vmatpush1.msra.mxu0 0.0
    %1170 = vmatprep.subr.mxu0 0.0
    %1171 = vmatpush1.msra.mxu0 0.0
    %1172 = vmatprep.subr.mxu0 0.0
    %1173 = vmatpush1.msra.mxu0 0.0
    %1174 = vmatprep.subr.mxu0 0.0
    %1175 = vmatpush1.msra.mxu0 0.0
    %1176 = vmatprep.subr.mxu0 0.0
    %1177 = vmatpush1.msra.mxu0 0.0
    %1178 = vmatprep.mubr.f32.mxu0 0.0
    %1179 = vmatmul.mubr.f32.gmra.mrb[0].mxu0 %v215
    %v1180 = vpop.f32.mrb[0].mxu0
    %v1181 = vadd.f32 0.0, %v1180
    %v1182 = vpop.f32.mrb[0].mxu0
    %1183 = vmatprep.mubr.f32.mxu0 0.0
    %1184 = vmatmul.mubr.f32.gmra.mrb[0].mxu0 %v217
    %v1185 = vpop.f32.mrb[0].mxu0
    %v1186 = vadd.f32 0.0, %v1185
    %v1187 = vpop.f32.mrb[0].mxu0
    %1188 = vmatprep.mubr.f32.mxu0 0.0
    %1189 = vmatmul.mubr.f32.gmra.mrb[0].mxu0 %v219
    %v1190 = vpop.f32.mrb[0].mxu0
    %v1191 = vadd.f32 0.0, %v1190
    %v1192 = vpop.f32.mrb[0].mxu0
    %1193 = vmatprep.mubr.f32.mxu0 0.0
    %1194 = vmatmul.mubr.f32.gmra.mrb[0].mxu0 %v221
    %v1195 = vpop.f32.mrb[0].mxu0
    %v1196 = vadd.f32 0.0, %v1195
    %v1197 = vpop.f32.mrb[0].mxu0
    %1198 = vdwg.mxu0
    %v1199 = vld [vmem:[%s5 + $0x4] sm:$0x1]
    %v1200 = vld [vmem:[%s5 + $0x5] sm:$0x1]
    %v1201 = vadd.f32 %v1181, %v1186
    %v1202 = vadd.f32 %v1201, %v1191
    %v1203 = vadd.f32 %v1202, %v1196
    %v1204 = vrot.slane %v1203, 4
    %v1205 = vadd.f32 %v1203, %v1204
    %v1206 = vrot.slane %v1205, 2
    %v1207 = vadd.f32 %v1205, %v1206
    %v1208 = vrot.slane %v1207, 1
    %v1209 = vadd.f32 %v1207, %v1208
    %v1210 = vmul.f32 %v1181, %v1181
    %v1211 = vmul.f32 %v1186, %v1186
    %v1212 = vmul.f32 %v1191, %v1191
    %v1213 = vmul.f32 %v1196, %v1196
    %v1214 = vadd.f32 %v1210, %v1211
    %v1215 = vadd.f32 %v1214, %v1212
    %v1216 = vadd.f32 %v1215, %v1213
    %v1217 = vrot.slane %v1216, 4
    %v1218 = vadd.f32 %v1216, %v1217
    %v1219 = vrot.slane %v1218, 2
    %v1220 = vadd.f32 %v1218, %v1219
    %v1221 = vrot.slane %v1220, 1
    %v1222 = vadd.f32 %v1220, %v1221
    %v1223 = vsel %vm449, %v1209, %v1222
    %1224 = vmatprep.subr.mxu0 0.0
    %1225 = vmatpush1.msra.mxu0 %v65
    %1226 = vmatprep.subr.mxu0 0.0
    %1227 = vmatpush1.msra.mxu0 %v66
    %1228 = vmatprep.subr.mxu0 0.0
    %1229 = vmatpush1.msra.mxu0 %v67
    %1230 = vmatprep.subr.mxu0 0.0
    %1231 = vmatpush1.msra.mxu0 %v68
    %1232 = vmatprep.subr.mxu0 0.0
    %1233 = vmatpush1.msra.mxu0 %v69
    %1234 = vmatprep.subr.mxu0 0.0
    %1235 = vmatpush1.msra.mxu0 %v70
    %1236 = vmatprep.subr.mxu0 0.0
    %1237 = vmatpush1.msra.mxu0 %v71
    %1238 = vmatprep.subr.mxu0 0.0
    %1239 = vmatpush1.msra.mxu0 %v72
    %1240 = vmatprep.subr.mxu0 0.0
    %1241 = vmatpush1.msra.mxu0 %v73
    %1242 = vmatprep.subr.mxu0 0.0
    %1243 = vmatpush1.msra.mxu0 %v74
    %1244 = vmatprep.subr.mxu0 0.0
    %1245 = vmatpush1.msra.mxu0 %v75
    %1246 = vmatprep.subr.mxu0 0.0
    %1247 = vmatpush1.msra.mxu0 %v76
    %1248 = vmatprep.subr.mxu0 0.0
    %1249 = vmatpush1.msra.mxu0 %v77
    %1250 = vmatprep.subr.mxu0 0.0
    %1251 = vmatpush1.msra.mxu0 %v78
    %1252 = vmatprep.subr.mxu0 0.0
    %1253 = vmatpush1.msra.mxu0 %v79
    %1254 = vmatprep.subr.mxu0 0.0
    %1255 = vmatpush1.msra.mxu0 %v80
    %1256 = vmatprep.subr.mxu0 0.0
    %1257 = vmatpush1.msra.mxu0 0.0
    %1258 = vmatprep.subr.mxu0 0.0
    %1259 = vmatpush1.msra.mxu0 0.0
    %1260 = vmatprep.subr.mxu0 0.0
    %1261 = vmatpush1.msra.mxu0 0.0
    %1262 = vmatprep.subr.mxu0 0.0
    %1263 = vmatpush1.msra.mxu0 0.0
    %1264 = vmatprep.subr.mxu0 0.0
    %1265 = vmatpush1.msra.mxu0 0.0
    %1266 = vmatprep.subr.mxu0 0.0
    %1267 = vmatpush1.msra.mxu0 0.0
    %1268 = vmatprep.subr.mxu0 0.0
    %1269 = vmatpush1.msra.mxu0 0.0
    %1270 = vmatprep.subr.mxu0 0.0
    %1271 = vmatpush1.msra.mxu0 0.0
    %1272 = vmatprep.subr.mxu0 0.0
    %1273 = vmatpush1.msra.mxu0 0.0
    %1274 = vmatprep.subr.mxu0 0.0
    %1275 = vmatpush1.msra.mxu0 0.0
    %1276 = vmatprep.subr.mxu0 0.0
    %1277 = vmatpush1.msra.mxu0 0.0
    %1278 = vmatprep.subr.mxu0 0.0
    %1279 = vmatpush1.msra.mxu0 0.0
    %1280 = vmatprep.subr.mxu0 0.0
    %1281 = vmatpush1.msra.mxu0 0.0
    %1282 = vmatprep.subr.mxu0 0.0
    %1283 = vmatpush1.msra.mxu0 0.0
    %1284 = vmatprep.subr.mxu0 0.0
    %1285 = vmatpush1.msra.mxu0 0.0
    %1286 = vmatprep.subr.mxu0 0.0
    %1287 = vmatpush1.msra.mxu0 0.0
    %1288 = vmatprep.mubr.f32.mxu0 0.0
    %1289 = vmatmul.mubr.f32.gmra.mrb[0].mxu0 %v1223
    %v1290 = vpop.f32.mrb[0].mxu0
    %v1291 = vadd.f32 0.0, %v1290
    %v1292 = vpop.f32.mrb[0].mxu0
    %1293 = vdwg.mxu0
    %v1294 = vmul.f32 %v1291, 0.001953125
    %v1295 = vmul.f32 %v1294, %v1294
    %v1297 = vrot.slane %v1295, 7
    %v1299 = vsub.f32 %v1294, %v1297
    %v1300 = vadd.f32 %v1299, 1e-05
    %v1301 = vrsqrt.pop %v1300
    %v1303 = vrot.slane %v1301, 1
    %v1305 = vmul.f32 %v1199, %v1303
    %v1306 = vmul.f32 %v1294, %v1305
    %v1307 = vsub.f32 %v1200, %v1306
    %v1308 = vlaneseq
    %v1309 = vshrl.u32 %v1308, 7
    %v1310 = vsub.s32 0, %v1309
    %v1311 = vrot.slane %v1305, %v1310
    %v1312 = vmul.f32 %v1181, %v1311
    %v1313 = vmul.f32 %v1186, %v1311
    %v1314 = vmul.f32 %v1191, %v1311
    %v1315 = vmul.f32 %v1196, %v1311
    %v1316 = vlaneseq
    %v1317 = vshrl.u32 %v1316, 7
    %v1318 = vsub.s32 0, %v1317
    %v1319 = vrot.slane %v1307, %v1318
    %v1320 = vadd.f32 %v1312, %v1319
    %v1321 = vadd.f32 %v1313, %v1319
    %v1322 = vadd.f32 %v1314, %v1319
    %v1323 = vadd.f32 %v1315, %v1319
    %v1324 = vadd.f32 %v1102, %v1320
    %v1325 = vadd.f32 %v1103, %v1321
    %v1326 = vadd.f32 %v1104, %v1322
    %v1327 = vadd.f32 %v1105, %v1323
    %1328 = vst [vmem:[#allocation8] sm:$0xff] %v1324
    %1329 = vst [vmem:[#allocation8 + $0x8] sm:$0xff] %v1325
    %1330 = vst [vmem:[#allocation8 + $0x10] sm:$0xff] %v1326
    %1331 = vst [vmem:[#allocation8 + $0x18] sm:$0xff] %v1327
    // Predicated region
    $region38: #{tpu_custom_call.1} parent=1 // pred_check
      _
    $region39: #{tpu_custom_call.1} parent=1 // pred_check_branch
      %1333 = sbr.rel (0) target = $region41
    $region40: #{tpu_custom_call.1} parent=1 // pred_region
      %s1335 = ssub.s32 512, 512
      %1336 = vsyncadd [#allocation4], %s1335
      %s1337 = sshll.u32 [#allocation8], 4
      %s1338 = int_to_ptr.vmem [resolvable:$true] %s1337
      %1343 = dma.vmem_to_hbm [thread:$0]  %s1338, 512, %s6, [#allocation4], 128, 128, 8
    $region41: #{tpu_custom_call.1} parent=1 // pred_fallthru
      _
    // Predicated region
    $region42: #{tpu_custom_call.1} parent=1 // pred_check
      _
    $region43: #{tpu_custom_call.1} parent=1 // pred_check_branch
      %1345 = sbr.rel (0) target = $region45
    $region44: #{tpu_custom_call.1} parent=1 // pred_region
      %1346 = dma.done [#allocation4], 512
    $region45: #{tpu_custom_call.1} parent=1 // pred_fallthru
      _
    %1347 = vsyncpa [#allocation3], 1
    %1348 = vsyncpa [#allocation6], 1
    %1349 = vsyncpa [#allocation4], 1

</llo_original>
